<compile_context>
chip_gen: v5e
topology: v5e:2x2
jax: 0.10.0
libtpu: 0.0.40
codegen_flags: <defaults>
</compile_context>

<pallas_src>
import functools
import math

import jax
import jax.numpy as jnp
from jax.experimental import pallas as pl
from jax.experimental.pallas import tpu as pltpu


def _round_up(x, m):
    return (x + m - 1) // m * m


def _encoder_block_kernel(x_ref, w1_ref, b1_ref, w2_ref, b2_ref, sel_ref,
                          o_ref, *, K, stride, L1_full, L1, L2, B_TILE):
    # x_ref : (B_TILE, C_in, L)          one tile of batch elements
    # w1_ref: (C_out_p, K*C_in)          conv1 weights, tap-major flattened
    # w2_ref: (K, C_out_p, C_out_p)      conv2 weights, one matrix per tap
    # sel_ref: (L1_full, L1)             0/1 column-selection matrix (stride)
    # o_ref : (B_TILE, C_out_p, L2)
    w1 = w1_ref[...]
    b1 = b1_ref[...]                     # (C_out_p, 1)
    w2 = w2_ref[...]                     # (K, C_out_p, C_out_p)
    b2 = b2_ref[...]                     # (C_out_p, 1)
    sel = sel_ref[...]                   # (L1_full, L1)
    c_out_p = w1.shape[0]

    for b in range(B_TILE):              # unrolled at trace time
        x_b = x_ref[b]                   # (C_in, L)

        # ---- Conv1d(chin, chout, K, stride) + ReLU ----------------------
        # Dense (stride-1) im2col from contiguous static slices, then apply
        # the stride as a 0/1 selection matmul (no strided lane gathers),
        # then one MXU matmul against the flattened weights.
        xcat = jnp.concatenate(
            [x_b[:, t:t + L1_full] for t in range(K)], axis=0)  # (K*C_in, L1_full)
        if stride > 1:
            xcat = jnp.dot(xcat, sel,
                           preferred_element_type=jnp.float32)   # (K*C_in, L1)
        y1 = jnp.dot(w1, xcat, preferred_element_type=jnp.float32)
        y1 = jnp.maximum(y1 + b1, 0.0)                            # (C_out_p, L1)

        # ---- Conv1d(chout, chout, K, 1) + ReLU --------------------------
        # Per-tap accumulation: never materializes the K-fold y1cat copy.
        y2 = jnp.zeros((c_out_p, L2), jnp.float32)
        for t in range(K):
            y2 += jnp.dot(w2[t], y1[:, t:t + L2],
                          preferred_element_type=jnp.float32)
        y2 = jnp.maximum(y2 + b2, 0.0)                            # (C_out_p, L2)

        o_ref[b] = y2.astype(o_ref.dtype)


def encoder_block_pallas(x_ncl, w1, b1, w2, b2, stride, *, b_tile=8):
    """x_ncl: (N, C_in, L) float32 (PyTorch layout). Returns (N, C_out, L2)."""
    N, C_in, L = x_ncl.shape
    C_out, C_in_w, K = w1.shape
    assert C_in_w == C_in
    L1_full = L - K + 1                      # dense (stride-1) conv1 length
    L1 = (L - K) // stride + 1               # strided conv1 length
    L2 = L1 - K + 1                          # conv2 length
    assert L1 >= 1 and L2 >= 1

    C_out_p = _round_up(C_out, 8)            # aligned output channel slab

    # Batch tiling: b_tile elements per grid step; pad N if it doesn't divide.
    b_tile = max(1, min(b_tile, N))
    N_pad = _round_up(N, b_tile)
    x_in = x_ncl if N_pad == N else jnp.pad(
        x_ncl, ((0, N_pad - N), (0, 0), (0, 0)))
    num_btiles = N_pad // b_tile

    # Tiny weight-side prep (no work on x itself):
    # conv1 weights flattened tap-major to match the in-kernel im2col rows.
    w1_f = jnp.transpose(w1, (0, 2, 1)).reshape(C_out, K * C_in)
    w1_f = jnp.pad(w1_f, ((0, C_out_p - C_out), (0, 0)))
    b1_p = jnp.pad(b1, (0, C_out_p - C_out)).reshape(C_out_p, 1)
    # conv2 weights as one (C_out_p, C_out_p) matrix per tap.
    w2_p = jnp.pad(w2, ((0, C_out_p - C_out), (0, C_out_p - C_out), (0, 0)))
    w2_t = jnp.transpose(w2_p, (2, 0, 1))    # (K, C_out_p, C_out_p)
    b2_p = jnp.pad(b2, (0, C_out_p - C_out)).reshape(C_out_p, 1)
    # 0/1 selection matrix implementing the stride: sel[j, l] = (j == stride*l).
    sel = (jnp.arange(L1_full)[:, None] ==
           stride * jnp.arange(L1)[None, :]).astype(x_ncl.dtype)

    kernel = functools.partial(
        _encoder_block_kernel,
        K=K, stride=stride, L1_full=L1_full, L1=L1, L2=L2, B_TILE=b_tile)

    out = pl.pallas_call(
        kernel,
        out_shape=jax.ShapeDtypeStruct((N_pad, C_out_p, L2), x_ncl.dtype),
        grid=(num_btiles,),
        in_specs=[
            # x in native layout, one batch tile per step (full last-two dims).
            pl.BlockSpec((b_tile, C_in, L), lambda n: (n, 0, 0)),
            # grid-resident operands (constant index maps).
            pl.BlockSpec((C_out_p, K * C_in), lambda n: (0, 0)),        # w1
            pl.BlockSpec((C_out_p, 1), lambda n: (0, 0)),               # b1
            pl.BlockSpec((K, C_out_p, C_out_p), lambda n: (0, 0, 0)),   # w2
            pl.BlockSpec((C_out_p, 1), lambda n: (0, 0)),               # b2
            pl.BlockSpec((L1_full, L1), lambda n: (0, 0)),              # sel
        ],
        out_specs=pl.BlockSpec((b_tile, C_out_p, L2), lambda n: (n, 0, 0)),
        compiler_params=pltpu.CompilerParams(
            dimension_semantics=("parallel",)),  # >=2 steps -> both v7x TCs
    )(x_in, w1_f, b1_p, w2_t, b2_p, sel)

    # Drop batch padding and the aligned channel padding (no-op when already
    # aligned, as here).
    return out[:N, :C_out, :]


def encoder_block_reference(x_ncl, w1, b1, w2, b2, stride):
    """Pure-JAX reference matching PyTorch Conv1d semantics (VALID, no dilation)."""
    dn = ('NCH', 'OIH', 'NCH')
    y = jax.lax.conv_general_dilated(x_ncl, w1, (stride,), 'VALID',
                                     dimension_numbers=dn)
    y = jnp.maximum(y + b1[None, :, None], 0.0)
    y = jax.lax.conv_general_dilated(y, w2, (1,), 'VALID',
                                     dimension_numbers=dn)
    return jnp.maximum(y + b2[None, :, None], 0.0)


if __name__ == "__main__":
    # EncoderBlock(chin, chout, kernel_size, stride) hyperparameters (small).
    chin, chout, kernel_size, stride = 4, 8, 4, 2
    N, L = 16, 64          # batch of 16 -> two grid steps of B_TILE=8

    key = jax.random.PRNGKey(0)
    k_x, k_w1, k_b1, k_w2, k_b2 = jax.random.split(key, 5)

    x = jax.random.normal(k_x, (N, chin, L), dtype=jnp.float32)

    # Deterministic PyTorch-style uniform init: U(-1/sqrt(fan_in), 1/sqrt(fan_in))
    bound1 = 1.0 / math.sqrt(chin * kernel_size)
    w1 = jax.random.uniform(k_w1, (chout, chin, kernel_size),
                            minval=-bound1, maxval=bound1, dtype=jnp.float32)
    b1 = jax.random.uniform(k_b1, (chout,),
                            minval=-bound1, maxval=bound1, dtype=jnp.float32)
    bound2 = 1.0 / math.sqrt(chout * kernel_size)
    w2 = jax.random.uniform(k_w2, (chout, chout, kernel_size),
                            minval=-bound2, maxval=bound2, dtype=jnp.float32)
    b2 = jax.random.uniform(k_b2, (chout,),
                            minval=-bound2, maxval=bound2, dtype=jnp.float32)

    out = encoder_block_pallas(x, w1, b1, w2, b2, stride, b_tile=8)
    out = jax.block_until_ready(out)

    ref = encoder_block_reference(x, w1, b1, w2, b2, stride)
    assert out.shape == ref.shape, (out.shape, ref.shape)
    assert jnp.allclose(out, ref, atol=1e-5, rtol=1e-5), (
        float(jnp.max(jnp.abs(out - ref))))

    print("KERNEL_OK")
</pallas_src>

<mosaic_0001>
module attributes {stable_mosaic.version = 11 : i64} {
  func.func @_encoder_block_kernel(%arg0: i32, %arg1: memref<8x4x64xf32, #tpu.memory_space<vmem>>, %arg2: memref<8x16xf32, #tpu.memory_space<vmem>>, %arg3: memref<8x1xf32, #tpu.memory_space<vmem>>, %arg4: memref<4x8x8xf32, #tpu.memory_space<vmem>>, %arg5: memref<8x1xf32, #tpu.memory_space<vmem>>, %arg6: memref<61x31xf32, #tpu.memory_space<vmem>>, %arg7: memref<8x8x28xf32, #tpu.memory_space<vmem>>) attributes {dimension_semantics = [#tpu.dimension_semantics<parallel>], iteration_bounds = array<i64: 2>, scalar_prefetch = 0 : i64, scratch_operands = 0 : i64, tpu.core_type = #tpu.core_type<tc>, window_params = [{transform_indices = @transform_0, window_bounds = array<i64: 8, 4, 64>}, {pipeline_mode = #tpu.pipeline_mode<synchronous>, transform_indices = @transform_1, window_bounds = array<i64: 8, 16>}, {pipeline_mode = #tpu.pipeline_mode<synchronous>, transform_indices = @transform_2, window_bounds = array<i64: 8, 1>}, {pipeline_mode = #tpu.pipeline_mode<synchronous>, transform_indices = @transform_3, window_bounds = array<i64: 4, 8, 8>}, {pipeline_mode = #tpu.pipeline_mode<synchronous>, transform_indices = @transform_4, window_bounds = array<i64: 8, 1>}, {pipeline_mode = #tpu.pipeline_mode<synchronous>, transform_indices = @transform_5, window_bounds = array<i64: 61, 31>}, {transform_indices = @transform_6, window_bounds = array<i64: 8, 8, 28>}]} {
    %c0 = arith.constant 0 : index
    %c0_0 = arith.constant 0 : index
    %0 = vector.load %arg2[%c0, %c0_0] : memref<8x16xf32, #tpu.memory_space<vmem>>, vector<8x16xf32>
    %c0_1 = arith.constant 0 : index
    %c0_2 = arith.constant 0 : index
    %1 = vector.load %arg3[%c0_1, %c0_2] : memref<8x1xf32, #tpu.memory_space<vmem>>, vector<8x1xf32>
    %c0_3 = arith.constant 0 : index
    %c0_4 = arith.constant 0 : index
    %c0_5 = arith.constant 0 : index
    %2 = vector.load %arg4[%c0_3, %c0_4, %c0_5] : memref<4x8x8xf32, #tpu.memory_space<vmem>>, vector<4x8x8xf32>
    %c0_6 = arith.constant 0 : index
    %c0_7 = arith.constant 0 : index
    %3 = vector.load %arg5[%c0_6, %c0_7] : memref<8x1xf32, #tpu.memory_space<vmem>>, vector<8x1xf32>
    %c0_8 = arith.constant 0 : index
    %c0_9 = arith.constant 0 : index
    %4 = vector.load %arg6[%c0_8, %c0_9] : memref<61x31xf32, #tpu.memory_space<vmem>>, vector<61x31xf32>
    %c0_10 = arith.constant 0 : index
    %c0_11 = arith.constant 0 : index
    %c0_12 = arith.constant 0 : index
    %5 = vector.load %arg1[%c0_10, %c0_11, %c0_12] : memref<8x4x64xf32, #tpu.memory_space<vmem>>, vector<1x4x64xf32>
    %6 = vector.shape_cast %5 : vector<1x4x64xf32> to vector<4x64xf32>
    %7 = vector.extract_strided_slice %6 {offsets = [0, 0], sizes = [4, 61], strides = [1, 1]} : vector<4x64xf32> to vector<4x61xf32>
    %8 = vector.extract_strided_slice %6 {offsets = [0, 1], sizes = [4, 61], strides = [1, 1]} : vector<4x64xf32> to vector<4x61xf32>
    %9 = vector.extract_strided_slice %6 {offsets = [0, 2], sizes = [4, 61], strides = [1, 1]} : vector<4x64xf32> to vector<4x61xf32>
    %10 = vector.extract_strided_slice %6 {offsets = [0, 3], sizes = [4, 61], strides = [1, 1]} : vector<4x64xf32> to vector<4x61xf32>
    %11 = tpu.concatenate %7, %8, %9, %10 in 0 : vector<4x61xf32>, vector<4x61xf32>, vector<4x61xf32>, vector<4x61xf32> -> vector<16x61xf32>
    %cst = arith.constant dense<0.000000e+00> : vector<16x31xf32>
    %12 = tpu.matmul %11, %4, %cst {dimension_numbers = #tpu.dot_dimension_numbers<[1], [0], [0], [1], [0, 0, 1, 1], [], []>} : vector<16x61xf32>, vector<61x31xf32>, vector<16x31xf32> -> vector<16x31xf32>
    %cst_13 = arith.constant dense<0.000000e+00> : vector<8x31xf32>
    %13 = tpu.matmul %0, %12, %cst_13 {dimension_numbers = #tpu.dot_dimension_numbers<[1], [0], [0], [1], [0, 0, 1, 1], [], []>} : vector<8x16xf32>, vector<16x31xf32>, vector<8x31xf32> -> vector<8x31xf32>
    %14 = vector.broadcast %1 : vector<8x1xf32> to vector<8x31xf32>
    %15 = arith.addf %13, %14 : vector<8x31xf32>
    %cst_14 = arith.constant 0.000000e+00 : f32
    %16 = vector.broadcast %cst_14 : f32 to vector<8x31xf32>
    %17 = arith.maximumf %15, %16 : vector<8x31xf32>
    %cst_15 = arith.constant 0.000000e+00 : f32
    %18 = vector.broadcast %cst_15 : f32 to vector<8x28xf32>
    %19 = vector.extract_strided_slice %2 {offsets = [0, 0, 0], sizes = [1, 8, 8], strides = [1, 1, 1]} : vector<4x8x8xf32> to vector<1x8x8xf32>
    %20 = vector.shape_cast %19 : vector<1x8x8xf32> to vector<8x8xf32>
    %21 = vector.extract_strided_slice %17 {offsets = [0, 0], sizes = [8, 28], strides = [1, 1]} : vector<8x31xf32> to vector<8x28xf32>
    %cst_16 = arith.constant dense<0.000000e+00> : vector<8x28xf32>
    %22 = tpu.matmul %20, %21, %cst_16 {dimension_numbers = #tpu.dot_dimension_numbers<[1], [0], [0], [1], [0, 0, 1, 1], [], []>} : vector<8x8xf32>, vector<8x28xf32>, vector<8x28xf32> -> vector<8x28xf32>
    %23 = arith.addf %18, %22 : vector<8x28xf32>
    %24 = vector.extract_strided_slice %2 {offsets = [1, 0, 0], sizes = [1, 8, 8], strides = [1, 1, 1]} : vector<4x8x8xf32> to vector<1x8x8xf32>
    %25 = vector.shape_cast %24 : vector<1x8x8xf32> to vector<8x8xf32>
    %26 = vector.extract_strided_slice %17 {offsets = [0, 1], sizes = [8, 28], strides = [1, 1]} : vector<8x31xf32> to vector<8x28xf32>
    %cst_17 = arith.constant dense<0.000000e+00> : vector<8x28xf32>
    %27 = tpu.matmul %25, %26, %cst_17 {dimension_numbers = #tpu.dot_dimension_numbers<[1], [0], [0], [1], [0, 0, 1, 1], [], []>} : vector<8x8xf32>, vector<8x28xf32>, vector<8x28xf32> -> vector<8x28xf32>
    %28 = arith.addf %23, %27 : vector<8x28xf32>
    %29 = vector.extract_strided_slice %2 {offsets = [2, 0, 0], sizes = [1, 8, 8], strides = [1, 1, 1]} : vector<4x8x8xf32> to vector<1x8x8xf32>
    %30 = vector.shape_cast %29 : vector<1x8x8xf32> to vector<8x8xf32>
    %31 = vector.extract_strided_slice %17 {offsets = [0, 2], sizes = [8, 28], strides = [1, 1]} : vector<8x31xf32> to vector<8x28xf32>
    %cst_18 = arith.constant dense<0.000000e+00> : vector<8x28xf32>
    %32 = tpu.matmul %30, %31, %cst_18 {dimension_numbers = #tpu.dot_dimension_numbers<[1], [0], [0], [1], [0, 0, 1, 1], [], []>} : vector<8x8xf32>, vector<8x28xf32>, vector<8x28xf32> -> vector<8x28xf32>
    %33 = arith.addf %28, %32 : vector<8x28xf32>
    %34 = vector.extract_strided_slice %2 {offsets = [3, 0, 0], sizes = [1, 8, 8], strides = [1, 1, 1]} : vector<4x8x8xf32> to vector<1x8x8xf32>
    %35 = vector.shape_cast %34 : vector<1x8x8xf32> to vector<8x8xf32>
    %36 = vector.extract_strided_slice %17 {offsets = [0, 3], sizes = [8, 28], strides = [1, 1]} : vector<8x31xf32> to vector<8x28xf32>
    %cst_19 = arith.constant dense<0.000000e+00> : vector<8x28xf32>
    %37 = tpu.matmul %35, %36, %cst_19 {dimension_numbers = #tpu.dot_dimension_numbers<[1], [0], [0], [1], [0, 0, 1, 1], [], []>} : vector<8x8xf32>, vector<8x28xf32>, vector<8x28xf32> -> vector<8x28xf32>
    %38 = arith.addf %33, %37 : vector<8x28xf32>
    %39 = vector.broadcast %3 : vector<8x1xf32> to vector<8x28xf32>
    %40 = arith.addf %38, %39 : vector<8x28xf32>
    %cst_20 = arith.constant 0.000000e+00 : f32
    %41 = vector.broadcast %cst_20 : f32 to vector<8x28xf32>
    %42 = arith.maximumf %40, %41 : vector<8x28xf32>
    %c0_21 = arith.constant 0 : index
    %c0_22 = arith.constant 0 : index
    %c0_23 = arith.constant 0 : index
    %43 = vector.load %arg7[%c0_21, %c0_22, %c0_23] : memref<8x8x28xf32, #tpu.memory_space<vmem>>, vector<1x8x28xf32>
    %44 = vector.shape_cast %43 : vector<1x8x28xf32> to vector<8x28xf32>
    %45 = vector.shape_cast %42 : vector<8x28xf32> to vector<1x8x28xf32>
    tpu.vector_store %arg7[%c0_21, %c0_22, %c0_23], %45 {strides = array<i32>} : memref<8x8x28xf32, #tpu.memory_space<vmem>>, vector<1x8x28xf32>,
    %c1 = arith.constant 1 : index
    %c0_24 = arith.constant 0 : index
    %c0_25 = arith.constant 0 : index
    %46 = vector.load %arg1[%c1, %c0_24, %c0_25] : memref<8x4x64xf32, #tpu.memory_space<vmem>>, vector<1x4x64xf32>
    %47 = vector.shape_cast %46 : vector<1x4x64xf32> to vector<4x64xf32>
    %48 = vector.extract_strided_slice %47 {offsets = [0, 0], sizes = [4, 61], strides = [1, 1]} : vector<4x64xf32> to vector<4x61xf32>
    %49 = vector.extract_strided_slice %47 {offsets = [0, 1], sizes = [4, 61], strides = [1, 1]} : vector<4x64xf32> to vector<4x61xf32>
    %50 = vector.extract_strided_slice %47 {offsets = [0, 2], sizes = [4, 61], strides = [1, 1]} : vector<4x64xf32> to vector<4x61xf32>
    %51 = vector.extract_strided_slice %47 {offsets = [0, 3], sizes = [4, 61], strides = [1, 1]} : vector<4x64xf32> to vector<4x61xf32>
    %52 = tpu.concatenate %48, %49, %50, %51 in 0 : vector<4x61xf32>, vector<4x61xf32>, vector<4x61xf32>, vector<4x61xf32> -> vector<16x61xf32>
    %cst_26 = arith.constant dense<0.000000e+00> : vector<16x31xf32>
    %53 = tpu.matmul %52, %4, %cst_26 {dimension_numbers = #tpu.dot_dimension_numbers<[1], [0], [0], [1], [0, 0, 1, 1], [], []>} : vector<16x61xf32>, vector<61x31xf32>, vector<16x31xf32> -> vector<16x31xf32>
    %cst_27 = arith.constant dense<0.000000e+00> : vector<8x31xf32>
    %54 = tpu.matmul %0, %53, %cst_27 {dimension_numbers = #tpu.dot_dimension_numbers<[1], [0], [0], [1], [0, 0, 1, 1], [], []>} : vector<8x16xf32>, vector<16x31xf32>, vector<8x31xf32> -> vector<8x31xf32>
    %55 = vector.broadcast %1 : vector<8x1xf32> to vector<8x31xf32>
    %56 = arith.addf %54, %55 : vector<8x31xf32>
    %cst_28 = arith.constant 0.000000e+00 : f32
    %57 = vector.broadcast %cst_28 : f32 to vector<8x31xf32>
    %58 = arith.maximumf %56, %57 : vector<8x31xf32>
    %cst_29 = arith.constant 0.000000e+00 : f32
    %59 = vector.broadcast %cst_29 : f32 to vector<8x28xf32>
    %60 = vector.extract_strided_slice %2 {offsets = [0, 0, 0], sizes = [1, 8, 8], strides = [1, 1, 1]} : vector<4x8x8xf32> to vector<1x8x8xf32>
    %61 = vector.shape_cast %60 : vector<1x8x8xf32> to vector<8x8xf32>
    %62 = vector.extract_strided_slice %58 {offsets = [0, 0], sizes = [8, 28], strides = [1, 1]} : vector<8x31xf32> to vector<8x28xf32>
    %cst_30 = arith.constant dense<0.000000e+00> : vector<8x28xf32>
    %63 = tpu.matmul %61, %62, %cst_30 {dimension_numbers = #tpu.dot_dimension_numbers<[1], [0], [0], [1], [0, 0, 1, 1], [], []>} : vector<8x8xf32>, vector<8x28xf32>, vector<8x28xf32> -> vector<8x28xf32>
    %64 = arith.addf %59, %63 : vector<8x28xf32>
    %65 = vector.extract_strided_slice %2 {offsets = [1, 0, 0], sizes = [1, 8, 8], strides = [1, 1, 1]} : vector<4x8x8xf32> to vector<1x8x8xf32>
    %66 = vector.shape_cast %65 : vector<1x8x8xf32> to vector<8x8xf32>
    %67 = vector.extract_strided_slice %58 {offsets = [0, 1], sizes = [8, 28], strides = [1, 1]} : vector<8x31xf32> to vector<8x28xf32>
    %cst_31 = arith.constant dense<0.000000e+00> : vector<8x28xf32>
    %68 = tpu.matmul %66, %67, %cst_31 {dimension_numbers = #tpu.dot_dimension_numbers<[1], [0], [0], [1], [0, 0, 1, 1], [], []>} : vector<8x8xf32>, vector<8x28xf32>, vector<8x28xf32> -> vector<8x28xf32>
    %69 = arith.addf %64, %68 : vector<8x28xf32>
    %70 = vector.extract_strided_slice %2 {offsets = [2, 0, 0], sizes = [1, 8, 8], strides = [1, 1, 1]} : vector<4x8x8xf32> to vector<1x8x8xf32>
    %71 = vector.shape_cast %70 : vector<1x8x8xf32> to vector<8x8xf32>
    %72 = vector.extract_strided_slice %58 {offsets = [0, 2], sizes = [8, 28], strides = [1, 1]} : vector<8x31xf32> to vector<8x28xf32>
    %cst_32 = arith.constant dense<0.000000e+00> : vector<8x28xf32>
    %73 = tpu.matmul %71, %72, %cst_32 {dimension_numbers = #tpu.dot_dimension_numbers<[1], [0], [0], [1], [0, 0, 1, 1], [], []>} : vector<8x8xf32>, vector<8x28xf32>, vector<8x28xf32> -> vector<8x28xf32>
    %74 = arith.addf %69, %73 : vector<8x28xf32>
    %75 = vector.extract_strided_slice %2 {offsets = [3, 0, 0], sizes = [1, 8, 8], strides = [1, 1, 1]} : vector<4x8x8xf32> to vector<1x8x8xf32>
    %76 = vector.shape_cast %75 : vector<1x8x8xf32> to vector<8x8xf32>
    %77 = vector.extract_strided_slice %58 {offsets = [0, 3], sizes = [8, 28], strides = [1, 1]} : vector<8x31xf32> to vector<8x28xf32>
    %cst_33 = arith.constant dense<0.000000e+00> : vector<8x28xf32>
    %78 = tpu.matmul %76, %77, %cst_33 {dimension_numbers = #tpu.dot_dimension_numbers<[1], [0], [0], [1], [0, 0, 1, 1], [], []>} : vector<8x8xf32>, vector<8x28xf32>, vector<8x28xf32> -> vector<8x28xf32>
    %79 = arith.addf %74, %78 : vector<8x28xf32>
    %80 = vector.broadcast %3 : vector<8x1xf32> to vector<8x28xf32>
    %81 = arith.addf %79, %80 : vector<8x28xf32>
    %cst_34 = arith.constant 0.000000e+00 : f32
    %82 = vector.broadcast %cst_34 : f32 to vector<8x28xf32>
    %83 = arith.maximumf %81, %82 : vector<8x28xf32>
    %c1_35 = arith.constant 1 : index
    %c0_36 = arith.constant 0 : index
    %c0_37 = arith.constant 0 : index
    %84 = vector.load %arg7[%c1_35, %c0_36, %c0_37] : memref<8x8x28xf32, #tpu.memory_space<vmem>>, vector<1x8x28xf32>
    %85 = vector.shape_cast %84 : vector<1x8x28xf32> to vector<8x28xf32>
    %86 = vector.shape_cast %83 : vector<8x28xf32> to vector<1x8x28xf32>
    tpu.vector_store %arg7[%c1_35, %c0_36, %c0_37], %86 {strides = array<i32>} : memref<8x8x28xf32, #tpu.memory_space<vmem>>, vector<1x8x28xf32>,
    %c2 = arith.constant 2 : index
    %c0_38 = arith.constant 0 : index
    %c0_39 = arith.constant 0 : index
    %87 = vector.load %arg1[%c2, %c0_38, %c0_39] : memref<8x4x64xf32, #tpu.memory_space<vmem>>, vector<1x4x64xf32>
    %88 = vector.shape_cast %87 : vector<1x4x64xf32> to vector<4x64xf32>
    %89 = vector.extract_strided_slice %88 {offsets = [0, 0], sizes = [4, 61], strides = [1, 1]} : vector<4x64xf32> to vector<4x61xf32>
    %90 = vector.extract_strided_slice %88 {offsets = [0, 1], sizes = [4, 61], strides = [1, 1]} : vector<4x64xf32> to vector<4x61xf32>
    %91 = vector.extract_strided_slice %88 {offsets = [0, 2], sizes = [4, 61], strides = [1, 1]} : vector<4x64xf32> to vector<4x61xf32>
    %92 = vector.extract_strided_slice %88 {offsets = [0, 3], sizes = [4, 61], strides = [1, 1]} : vector<4x64xf32> to vector<4x61xf32>
    %93 = tpu.concatenate %89, %90, %91, %92 in 0 : vector<4x61xf32>, vector<4x61xf32>, vector<4x61xf32>, vector<4x61xf32> -> vector<16x61xf32>
    %cst_40 = arith.constant dense<0.000000e+00> : vector<16x31xf32>
    %94 = tpu.matmul %93, %4, %cst_40 {dimension_numbers = #tpu.dot_dimension_numbers<[1], [0], [0], [1], [0, 0, 1, 1], [], []>} : vector<16x61xf32>, vector<61x31xf32>, vector<16x31xf32> -> vector<16x31xf32>
    %cst_41 = arith.constant dense<0.000000e+00> : vector<8x31xf32>
    %95 = tpu.matmul %0, %94, %cst_41 {dimension_numbers = #tpu.dot_dimension_numbers<[1], [0], [0], [1], [0, 0, 1, 1], [], []>} : vector<8x16xf32>, vector<16x31xf32>, vector<8x31xf32> -> vector<8x31xf32>
    %96 = vector.broadcast %1 : vector<8x1xf32> to vector<8x31xf32>
    %97 = arith.addf %95, %96 : vector<8x31xf32>
    %cst_42 = arith.constant 0.000000e+00 : f32
    %98 = vector.broadcast %cst_42 : f32 to vector<8x31xf32>
    %99 = arith.maximumf %97, %98 : vector<8x31xf32>
    %cst_43 = arith.constant 0.000000e+00 : f32
    %100 = vector.broadcast %cst_43 : f32 to vector<8x28xf32>
    %101 = vector.extract_strided_slice %2 {offsets = [0, 0, 0], sizes = [1, 8, 8], strides = [1, 1, 1]} : vector<4x8x8xf32> to vector<1x8x8xf32>
    %102 = vector.shape_cast %101 : vector<1x8x8xf32> to vector<8x8xf32>
    %103 = vector.extract_strided_slice %99 {offsets = [0, 0], sizes = [8, 28], strides = [1, 1]} : vector<8x31xf32> to vector<8x28xf32>
    %cst_44 = arith.constant dense<0.000000e+00> : vector<8x28xf32>
    %104 = tpu.matmul %102, %103, %cst_44 {dimension_numbers = #tpu.dot_dimension_numbers<[1], [0], [0], [1], [0, 0, 1, 1], [], []>} : vector<8x8xf32>, vector<8x28xf32>, vector<8x28xf32> -> vector<8x28xf32>
    %105 = arith.addf %100, %104 : vector<8x28xf32>
    %106 = vector.extract_strided_slice %2 {offsets = [1, 0, 0], sizes = [1, 8, 8], strides = [1, 1, 1]} : vector<4x8x8xf32> to vector<1x8x8xf32>
    %107 = vector.shape_cast %106 : vector<1x8x8xf32> to vector<8x8xf32>
    %108 = vector.extract_strided_slice %99 {offsets = [0, 1], sizes = [8, 28], strides = [1, 1]} : vector<8x31xf32> to vector<8x28xf32>
    %cst_45 = arith.constant dense<0.000000e+00> : vector<8x28xf32>
    %109 = tpu.matmul %107, %108, %cst_45 {dimension_numbers = #tpu.dot_dimension_numbers<[1], [0], [0], [1], [0, 0, 1, 1], [], []>} : vector<8x8xf32>, vector<8x28xf32>, vector<8x28xf32> -> vector<8x28xf32>
    %110 = arith.addf %105, %109 : vector<8x28xf32>
    %111 = vector.extract_strided_slice %2 {offsets = [2, 0, 0], sizes = [1, 8, 8], strides = [1, 1, 1]} : vector<4x8x8xf32> to vector<1x8x8xf32>
    %112 = vector.shape_cast %111 : vector<1x8x8xf32> to vector<8x8xf32>
    %113 = vector.extract_strided_slice %99 {offsets = [0, 2], sizes = [8, 28], strides = [1, 1]} : vector<8x31xf32> to vector<8x28xf32>
    %cst_46 = arith.constant dense<0.000000e+00> : vector<8x28xf32>
    %114 = tpu.matmul %112, %113, %cst_46 {dimension_numbers = #tpu.dot_dimension_numbers<[1], [0], [0], [1], [0, 0, 1, 1], [], []>} : vector<8x8xf32>, vector<8x28xf32>, vector<8x28xf32> -> vector<8x28xf32>
    %115 = arith.addf %110, %114 : vector<8x28xf32>
    %116 = vector.extract_strided_slice %2 {offsets = [3, 0, 0], sizes = [1, 8, 8], strides = [1, 1, 1]} : vector<4x8x8xf32> to vector<1x8x8xf32>
    %117 = vector.shape_cast %116 : vector<1x8x8xf32> to vector<8x8xf32>
    %118 = vector.extract_strided_slice %99 {offsets = [0, 3], sizes = [8, 28], strides = [1, 1]} : vector<8x31xf32> to vector<8x28xf32>
    %cst_47 = arith.constant dense<0.000000e+00> : vector<8x28xf32>
    %119 = tpu.matmul %117, %118, %cst_47 {dimension_numbers = #tpu.dot_dimension_numbers<[1], [0], [0], [1], [0, 0, 1, 1], [], []>} : vector<8x8xf32>, vector<8x28xf32>, vector<8x28xf32> -> vector<8x28xf32>
    %120 = arith.addf %115, %119 : vector<8x28xf32>
    %121 = vector.broadcast %3 : vector<8x1xf32> to vector<8x28xf32>
    %122 = arith.addf %120, %121 : vector<8x28xf32>
    %cst_48 = arith.constant 0.000000e+00 : f32
    %123 = vector.broadcast %cst_48 : f32 to vector<8x28xf32>
    %124 = arith.maximumf %122, %123 : vector<8x28xf32>
    %c2_49 = arith.constant 2 : index
    %c0_50 = arith.constant 0 : index
    %c0_51 = arith.constant 0 : index
    %125 = vector.load %arg7[%c2_49, %c0_50, %c0_51] : memref<8x8x28xf32, #tpu.memory_space<vmem>>, vector<1x8x28xf32>
    %126 = vector.shape_cast %125 : vector<1x8x28xf32> to vector<8x28xf32>
    %127 = vector.shape_cast %124 : vector<8x28xf32> to vector<1x8x28xf32>
    tpu.vector_store %arg7[%c2_49, %c0_50, %c0_51], %127 {strides = array<i32>} : memref<8x8x28xf32, #tpu.memory_space<vmem>>, vector<1x8x28xf32>,
    %c3 = arith.constant 3 : index
    %c0_52 = arith.constant 0 : index
    %c0_53 = arith.constant 0 : index
    %128 = vector.load %arg1[%c3, %c0_52, %c0_53] : memref<8x4x64xf32, #tpu.memory_space<vmem>>, vector<1x4x64xf32>
    %129 = vector.shape_cast %128 : vector<1x4x64xf32> to vector<4x64xf32>
    %130 = vector.extract_strided_slice %129 {offsets = [0, 0], sizes = [4, 61], strides = [1, 1]} : vector<4x64xf32> to vector<4x61xf32>
    %131 = vector.extract_strided_slice %129 {offsets = [0, 1], sizes = [4, 61], strides = [1, 1]} : vector<4x64xf32> to vector<4x61xf32>
    %132 = vector.extract_strided_slice %129 {offsets = [0, 2], sizes = [4, 61], strides = [1, 1]} : vector<4x64xf32> to vector<4x61xf32>
    %133 = vector.extract_strided_slice %129 {offsets = [0, 3], sizes = [4, 61], strides = [1, 1]} : vector<4x64xf32> to vector<4x61xf32>
    %134 = tpu.concatenate %130, %131, %132, %133 in 0 : vector<4x61xf32>, vector<4x61xf32>, vector<4x61xf32>, vector<4x61xf32> -> vector<16x61xf32>
    %cst_54 = arith.constant dense<0.000000e+00> : vector<16x31xf32>
    %135 = tpu.matmul %134, %4, %cst_54 {dimension_numbers = #tpu.dot_dimension_numbers<[1], [0], [0], [1], [0, 0, 1, 1], [], []>} : vector<16x61xf32>, vector<61x31xf32>, vector<16x31xf32> -> vector<16x31xf32>
    %cst_55 = arith.constant dense<0.000000e+00> : vector<8x31xf32>
    %136 = tpu.matmul %0, %135, %cst_55 {dimension_numbers = #tpu.dot_dimension_numbers<[1], [0], [0], [1], [0, 0, 1, 1], [], []>} : vector<8x16xf32>, vector<16x31xf32>, vector<8x31xf32> -> vector<8x31xf32>
    %137 = vector.broadcast %1 : vector<8x1xf32> to vector<8x31xf32>
    %138 = arith.addf %136, %137 : vector<8x31xf32>
    %cst_56 = arith.constant 0.000000e+00 : f32
    %139 = vector.broadcast %cst_56 : f32 to vector<8x31xf32>
    %140 = arith.maximumf %138, %139 : vector<8x31xf32>
    %cst_57 = arith.constant 0.000000e+00 : f32
    %141 = vector.broadcast %cst_57 : f32 to vector<8x28xf32>
    %142 = vector.extract_strided_slice %2 {offsets = [0, 0, 0], sizes = [1, 8, 8], strides = [1, 1, 1]} : vector<4x8x8xf32> to vector<1x8x8xf32>
    %143 = vector.shape_cast %142 : vector<1x8x8xf32> to vector<8x8xf32>
    %144 = vector.extract_strided_slice %140 {offsets = [0, 0], sizes = [8, 28], strides = [1, 1]} : vector<8x31xf32> to vector<8x28xf32>
    %cst_58 = arith.constant dense<0.000000e+00> : vector<8x28xf32>
    %145 = tpu.matmul %143, %144, %cst_58 {dimension_numbers = #tpu.dot_dimension_numbers<[1], [0], [0], [1], [0, 0, 1, 1], [], []>} : vector<8x8xf32>, vector<8x28xf32>, vector<8x28xf32> -> vector<8x28xf32>
    %146 = arith.addf %141, %145 : vector<8x28xf32>
    %147 = vector.extract_strided_slice %2 {offsets = [1, 0, 0], sizes = [1, 8, 8], strides = [1, 1, 1]} : vector<4x8x8xf32> to vector<1x8x8xf32>
    %148 = vector.shape_cast %147 : vector<1x8x8xf32> to vector<8x8xf32>
    %149 = vector.extract_strided_slice %140 {offsets = [0, 1], sizes = [8, 28], strides = [1, 1]} : vector<8x31xf32> to vector<8x28xf32>
    %cst_59 = arith.constant dense<0.000000e+00> : vector<8x28xf32>
    %150 = tpu.matmul %148, %149, %cst_59 {dimension_numbers = #tpu.dot_dimension_numbers<[1], [0], [0], [1], [0, 0, 1, 1], [], []>} : vector<8x8xf32>, vector<8x28xf32>, vector<8x28xf32> -> vector<8x28xf32>
    %151 = arith.addf %146, %150 : vector<8x28xf32>
    %152 = vector.extract_strided_slice %2 {offsets = [2, 0, 0], sizes = [1, 8, 8], strides = [1, 1, 1]} : vector<4x8x8xf32> to vector<1x8x8xf32>
    %153 = vector.shape_cast %152 : vector<1x8x8xf32> to vector<8x8xf32>
    %154 = vector.extract_strided_slice %140 {offsets = [0, 2], sizes = [8, 28], strides = [1, 1]} : vector<8x31xf32> to vector<8x28xf32>
    %cst_60 = arith.constant dense<0.000000e+00> : vector<8x28xf32>
    %155 = tpu.matmul %153, %154, %cst_60 {dimension_numbers = #tpu.dot_dimension_numbers<[1], [0], [0], [1], [0, 0, 1, 1], [], []>} : vector<8x8xf32>, vector<8x28xf32>, vector<8x28xf32> -> vector<8x28xf32>
    %156 = arith.addf %151, %155 : vector<8x28xf32>
    %157 = vector.extract_strided_slice %2 {offsets = [3, 0, 0], sizes = [1, 8, 8], strides = [1, 1, 1]} : vector<4x8x8xf32> to vector<1x8x8xf32>
    %158 = vector.shape_cast %157 : vector<1x8x8xf32> to vector<8x8xf32>
    %159 = vector.extract_strided_slice %140 {offsets = [0, 3], sizes = [8, 28], strides = [1, 1]} : vector<8x31xf32> to vector<8x28xf32>
    %cst_61 = arith.constant dense<0.000000e+00> : vector<8x28xf32>
    %160 = tpu.matmul %158, %159, %cst_61 {dimension_numbers = #tpu.dot_dimension_numbers<[1], [0], [0], [1], [0, 0, 1, 1], [], []>} : vector<8x8xf32>, vector<8x28xf32>, vector<8x28xf32> -> vector<8x28xf32>
    %161 = arith.addf %156, %160 : vector<8x28xf32>
    %162 = vector.broadcast %3 : vector<8x1xf32> to vector<8x28xf32>
    %163 = arith.addf %161, %162 : vector<8x28xf32>
    %cst_62 = arith.constant 0.000000e+00 : f32
    %164 = vector.broadcast %cst_62 : f32 to vector<8x28xf32>
    %165 = arith.maximumf %163, %164 : vector<8x28xf32>
    %c3_63 = arith.constant 3 : index
    %c0_64 = arith.constant 0 : index
    %c0_65 = arith.constant 0 : index
    %166 = vector.load %arg7[%c3_63, %c0_64, %c0_65] : memref<8x8x28xf32, #tpu.memory_space<vmem>>, vector<1x8x28xf32>
    %167 = vector.shape_cast %166 : vector<1x8x28xf32> to vector<8x28xf32>
    %168 = vector.shape_cast %165 : vector<8x28xf32> to vector<1x8x28xf32>
    tpu.vector_store %arg7[%c3_63, %c0_64, %c0_65], %168 {strides = array<i32>} : memref<8x8x28xf32, #tpu.memory_space<vmem>>, vector<1x8x28xf32>,
    %c4 = arith.constant 4 : index
    %c0_66 = arith.constant 0 : index
    %c0_67 = arith.constant 0 : index
    %169 = vector.load %arg1[%c4, %c0_66, %c0_67] : memref<8x4x64xf32, #tpu.memory_space<vmem>>, vector<1x4x64xf32>
    %170 = vector.shape_cast %169 : vector<1x4x64xf32> to vector<4x64xf32>
    %171 = vector.extract_strided_slice %170 {offsets = [0, 0], sizes = [4, 61], strides = [1, 1]} : vector<4x64xf32> to vector<4x61xf32>
    %172 = vector.extract_strided_slice %170 {offsets = [0, 1], sizes = [4, 61], strides = [1, 1]} : vector<4x64xf32> to vector<4x61xf32>
    %173 = vector.extract_strided_slice %170 {offsets = [0, 2], sizes = [4, 61], strides = [1, 1]} : vector<4x64xf32> to vector<4x61xf32>
    %174 = vector.extract_strided_slice %170 {offsets = [0, 3], sizes = [4, 61], strides = [1, 1]} : vector<4x64xf32> to vector<4x61xf32>
    %175 = tpu.concatenate %171, %172, %173, %174 in 0 : vector<4x61xf32>, vector<4x61xf32>, vector<4x61xf32>, vector<4x61xf32> -> vector<16x61xf32>
    %cst_68 = arith.constant dense<0.000000e+00> : vector<16x31xf32>
    %176 = tpu.matmul %175, %4, %cst_68 {dimension_numbers = #tpu.dot_dimension_numbers<[1], [0], [0], [1], [0, 0, 1, 1], [], []>} : vector<16x61xf32>, vector<61x31xf32>, vector<16x31xf32> -> vector<16x31xf32>
    %cst_69 = arith.constant dense<0.000000e+00> : vector<8x31xf32>
    %177 = tpu.matmul %0, %176, %cst_69 {dimension_numbers = #tpu.dot_dimension_numbers<[1], [0], [0], [1], [0, 0, 1, 1], [], []>} : vector<8x16xf32>, vector<16x31xf32>, vector<8x31xf32> -> vector<8x31xf32>
    %178 = vector.broadcast %1 : vector<8x1xf32> to vector<8x31xf32>
    %179 = arith.addf %177, %178 : vector<8x31xf32>
    %cst_70 = arith.constant 0.000000e+00 : f32
    %180 = vector.broadcast %cst_70 : f32 to vector<8x31xf32>
    %181 = arith.maximumf %179, %180 : vector<8x31xf32>
    %cst_71 = arith.constant 0.000000e+00 : f32
    %182 = vector.broadcast %cst_71 : f32 to vector<8x28xf32>
    %183 = vector.extract_strided_slice %2 {offsets = [0, 0, 0], sizes = [1, 8, 8], strides = [1, 1, 1]} : vector<4x8x8xf32> to vector<1x8x8xf32>
    %184 = vector.shape_cast %183 : vector<1x8x8xf32> to vector<8x8xf32>
    %185 = vector.extract_strided_slice %181 {offsets = [0, 0], sizes = [8, 28], strides = [1, 1]} : vector<8x31xf32> to vector<8x28xf32>
    %cst_72 = arith.constant dense<0.000000e+00> : vector<8x28xf32>
    %186 = tpu.matmul %184, %185, %cst_72 {dimension_numbers = #tpu.dot_dimension_numbers<[1], [0], [0], [1], [0, 0, 1, 1], [], []>} : vector<8x8xf32>, vector<8x28xf32>, vector<8x28xf32> -> vector<8x28xf32>
    %187 = arith.addf %182, %186 : vector<8x28xf32>
    %188 = vector.extract_strided_slice %2 {offsets = [1, 0, 0], sizes = [1, 8, 8], strides = [1, 1, 1]} : vector<4x8x8xf32> to vector<1x8x8xf32>
    %189 = vector.shape_cast %188 : vector<1x8x8xf32> to vector<8x8xf32>
    %190 = vector.extract_strided_slice %181 {offsets = [0, 1], sizes = [8, 28], strides = [1, 1]} : vector<8x31xf32> to vector<8x28xf32>
    %cst_73 = arith.constant dense<0.000000e+00> : vector<8x28xf32>
    %191 = tpu.matmul %189, %190, %cst_73 {dimension_numbers = #tpu.dot_dimension_numbers<[1], [0], [0], [1], [0, 0, 1, 1], [], []>} : vector<8x8xf32>, vector<8x28xf32>, vector<8x28xf32> -> vector<8x28xf32>
    %192 = arith.addf %187, %191 : vector<8x28xf32>
    %193 = vector.extract_strided_slice %2 {offsets = [2, 0, 0], sizes = [1, 8, 8], strides = [1, 1, 1]} : vector<4x8x8xf32> to vector<1x8x8xf32>
    %194 = vector.shape_cast %193 : vector<1x8x8xf32> to vector<8x8xf32>
    %195 = vector.extract_strided_slice %181 {offsets = [0, 2], sizes = [8, 28], strides = [1, 1]} : vector<8x31xf32> to vector<8x28xf32>
    %cst_74 = arith.constant dense<0.000000e+00> : vector<8x28xf32>
    %196 = tpu.matmul %194, %195, %cst_74 {dimension_numbers = #tpu.dot_dimension_numbers<[1], [0], [0], [1], [0, 0, 1, 1], [], []>} : vector<8x8xf32>, vector<8x28xf32>, vector<8x28xf32> -> vector<8x28xf32>
    %197 = arith.addf %192, %196 : vector<8x28xf32>
    %198 = vector.extract_strided_slice %2 {offsets = [3, 0, 0], sizes = [1, 8, 8], strides = [1, 1, 1]} : vector<4x8x8xf32> to vector<1x8x8xf32>
    %199 = vector.shape_cast %198 : vector<1x8x8xf32> to vector<8x8xf32>
    %200 = vector.extract_strided_slice %181 {offsets = [0, 3], sizes = [8, 28], strides = [1, 1]} : vector<8x31xf32> to vector<8x28xf32>
    %cst_75 = arith.constant dense<0.000000e+00> : vector<8x28xf32>
    %201 = tpu.matmul %199, %200, %cst_75 {dimension_numbers = #tpu.dot_dimension_numbers<[1], [0], [0], [1], [0, 0, 1, 1], [], []>} : vector<8x8xf32>, vector<8x28xf32>, vector<8x28xf32> -> vector<8x28xf32>
    %202 = arith.addf %197, %201 : vector<8x28xf32>
    %203 = vector.broadcast %3 : vector<8x1xf32> to vector<8x28xf32>
    %204 = arith.addf %202, %203 : vector<8x28xf32>
    %cst_76 = arith.constant 0.000000e+00 : f32
    %205 = vector.broadcast %cst_76 : f32 to vector<8x28xf32>
    %206 = arith.maximumf %204, %205 : vector<8x28xf32>
    %c4_77 = arith.constant 4 : index
    %c0_78 = arith.constant 0 : index
    %c0_79 = arith.constant 0 : index
    %207 = vector.load %arg7[%c4_77, %c0_78, %c0_79] : memref<8x8x28xf32, #tpu.memory_space<vmem>>, vector<1x8x28xf32>
    %208 = vector.shape_cast %207 : vector<1x8x28xf32> to vector<8x28xf32>
    %209 = vector.shape_cast %206 : vector<8x28xf32> to vector<1x8x28xf32>
    tpu.vector_store %arg7[%c4_77, %c0_78, %c0_79], %209 {strides = array<i32>} : memref<8x8x28xf32, #tpu.memory_space<vmem>>, vector<1x8x28xf32>,
    %c5 = arith.constant 5 : index
    %c0_80 = arith.constant 0 : index
    %c0_81 = arith.constant 0 : index
    %210 = vector.load %arg1[%c5, %c0_80, %c0_81] : memref<8x4x64xf32, #tpu.memory_space<vmem>>, vector<1x4x64xf32>
    %211 = vector.shape_cast %210 : vector<1x4x64xf32> to vector<4x64xf32>
    %212 = vector.extract_strided_slice %211 {offsets = [0, 0], sizes = [4, 61], strides = [1, 1]} : vector<4x64xf32> to vector<4x61xf32>
    %213 = vector.extract_strided_slice %211 {offsets = [0, 1], sizes = [4, 61], strides = [1, 1]} : vector<4x64xf32> to vector<4x61xf32>
    %214 = vector.extract_strided_slice %211 {offsets = [0, 2], sizes = [4, 61], strides = [1, 1]} : vector<4x64xf32> to vector<4x61xf32>
    %215 = vector.extract_strided_slice %211 {offsets = [0, 3], sizes = [4, 61], strides = [1, 1]} : vector<4x64xf32> to vector<4x61xf32>
    %216 = tpu.concatenate %212, %213, %214, %215 in 0 : vector<4x61xf32>, vector<4x61xf32>, vector<4x61xf32>, vector<4x61xf32> -> vector<16x61xf32>
    %cst_82 = arith.constant dense<0.000000e+00> : vector<16x31xf32>
    %217 = tpu.matmul %216, %4, %cst_82 {dimension_numbers = #tpu.dot_dimension_numbers<[1], [0], [0], [1], [0, 0, 1, 1], [], []>} : vector<16x61xf32>, vector<61x31xf32>, vector<16x31xf32> -> vector<16x31xf32>
    %cst_83 = arith.constant dense<0.000000e+00> : vector<8x31xf32>
    %218 = tpu.matmul %0, %217, %cst_83 {dimension_numbers = #tpu.dot_dimension_numbers<[1], [0], [0], [1], [0, 0, 1, 1], [], []>} : vector<8x16xf32>, vector<16x31xf32>, vector<8x31xf32> -> vector<8x31xf32>
    %219 = vector.broadcast %1 : vector<8x1xf32> to vector<8x31xf32>
    %220 = arith.addf %218, %219 : vector<8x31xf32>
    %cst_84 = arith.constant 0.000000e+00 : f32
    %221 = vector.broadcast %cst_84 : f32 to vector<8x31xf32>
    %222 = arith.maximumf %220, %221 : vector<8x31xf32>
    %cst_85 = arith.constant 0.000000e+00 : f32
    %223 = vector.broadcast %cst_85 : f32 to vector<8x28xf32>
    %224 = vector.extract_strided_slice %2 {offsets = [0, 0, 0], sizes = [1, 8, 8], strides = [1, 1, 1]} : vector<4x8x8xf32> to vector<1x8x8xf32>
    %225 = vector.shape_cast %224 : vector<1x8x8xf32> to vector<8x8xf32>
    %226 = vector.extract_strided_slice %222 {offsets = [0, 0], sizes = [8, 28], strides = [1, 1]} : vector<8x31xf32> to vector<8x28xf32>
    %cst_86 = arith.constant dense<0.000000e+00> : vector<8x28xf32>
    %227 = tpu.matmul %225, %226, %cst_86 {dimension_numbers = #tpu.dot_dimension_numbers<[1], [0], [0], [1], [0, 0, 1, 1], [], []>} : vector<8x8xf32>, vector<8x28xf32>, vector<8x28xf32> -> vector<8x28xf32>
    %228 = arith.addf %223, %227 : vector<8x28xf32>
    %229 = vector.extract_strided_slice %2 {offsets = [1, 0, 0], sizes = [1, 8, 8], strides = [1, 1, 1]} : vector<4x8x8xf32> to vector<1x8x8xf32>
    %230 = vector.shape_cast %229 : vector<1x8x8xf32> to vector<8x8xf32>
    %231 = vector.extract_strided_slice %222 {offsets = [0, 1], sizes = [8, 28], strides = [1, 1]} : vector<8x31xf32> to vector<8x28xf32>
    %cst_87 = arith.constant dense<0.000000e+00> : vector<8x28xf32>
    %232 = tpu.matmul %230, %231, %cst_87 {dimension_numbers = #tpu.dot_dimension_numbers<[1], [0], [0], [1], [0, 0, 1, 1], [], []>} : vector<8x8xf32>, vector<8x28xf32>, vector<8x28xf32> -> vector<8x28xf32>
    %233 = arith.addf %228, %232 : vector<8x28xf32>
    %234 = vector.extract_strided_slice %2 {offsets = [2, 0, 0], sizes = [1, 8, 8], strides = [1, 1, 1]} : vector<4x8x8xf32> to vector<1x8x8xf32>
    %235 = vector.shape_cast %234 : vector<1x8x8xf32> to vector<8x8xf32>
    %236 = vector.extract_strided_slice %222 {offsets = [0, 2], sizes = [8, 28], strides = [1, 1]} : vector<8x31xf32> to vector<8x28xf32>
    %cst_88 = arith.constant dense<0.000000e+00> : vector<8x28xf32>
    %237 = tpu.matmul %235, %236, %cst_88 {dimension_numbers = #tpu.dot_dimension_numbers<[1], [0], [0], [1], [0, 0, 1, 1], [], []>} : vector<8x8xf32>, vector<8x28xf32>, vector<8x28xf32> -> vector<8x28xf32>
    %238 = arith.addf %233, %237 : vector<8x28xf32>
    %239 = vector.extract_strided_slice %2 {offsets = [3, 0, 0], sizes = [1, 8, 8], strides = [1, 1, 1]} : vector<4x8x8xf32> to vector<1x8x8xf32>
    %240 = vector.shape_cast %239 : vector<1x8x8xf32> to vector<8x8xf32>
    %241 = vector.extract_strided_slice %222 {offsets = [0, 3], sizes = [8, 28], strides = [1, 1]} : vector<8x31xf32> to vector<8x28xf32>
    %cst_89 = arith.constant dense<0.000000e+00> : vector<8x28xf32>
    %242 = tpu.matmul %240, %241, %cst_89 {dimension_numbers = #tpu.dot_dimension_numbers<[1], [0], [0], [1], [0, 0, 1, 1], [], []>} : vector<8x8xf32>, vector<8x28xf32>, vector<8x28xf32> -> vector<8x28xf32>
    %243 = arith.addf %238, %242 : vector<8x28xf32>
    %244 = vector.broadcast %3 : vector<8x1xf32> to vector<8x28xf32>
    %245 = arith.addf %243, %244 : vector<8x28xf32>
    %cst_90 = arith.constant 0.000000e+00 : f32
    %246 = vector.broadcast %cst_90 : f32 to vector<8x28xf32>
    %247 = arith.maximumf %245, %246 : vector<8x28xf32>
    %c5_91 = arith.constant 5 : index
    %c0_92 = arith.constant 0 : index
    %c0_93 = arith.constant 0 : index
    %248 = vector.load %arg7[%c5_91, %c0_92, %c0_93] : memref<8x8x28xf32, #tpu.memory_space<vmem>>, vector<1x8x28xf32>
    %249 = vector.shape_cast %248 : vector<1x8x28xf32> to vector<8x28xf32>
    %250 = vector.shape_cast %247 : vector<8x28xf32> to vector<1x8x28xf32>
    tpu.vector_store %arg7[%c5_91, %c0_92, %c0_93], %250 {strides = array<i32>} : memref<8x8x28xf32, #tpu.memory_space<vmem>>, vector<1x8x28xf32>,
    %c6 = arith.constant 6 : index
    %c0_94 = arith.constant 0 : index
    %c0_95 = arith.constant 0 : index
    %251 = vector.load %arg1[%c6, %c0_94, %c0_95] : memref<8x4x64xf32, #tpu.memory_space<vmem>>, vector<1x4x64xf32>
    %252 = vector.shape_cast %251 : vector<1x4x64xf32> to vector<4x64xf32>
    %253 = vector.extract_strided_slice %252 {offsets = [0, 0], sizes = [4, 61], strides = [1, 1]} : vector<4x64xf32> to vector<4x61xf32>
    %254 = vector.extract_strided_slice %252 {offsets = [0, 1], sizes = [4, 61], strides = [1, 1]} : vector<4x64xf32> to vector<4x61xf32>
    %255 = vector.extract_strided_slice %252 {offsets = [0, 2], sizes = [4, 61], strides = [1, 1]} : vector<4x64xf32> to vector<4x61xf32>
    %256 = vector.extract_strided_slice %252 {offsets = [0, 3], sizes = [4, 61], strides = [1, 1]} : vector<4x64xf32> to vector<4x61xf32>
    %257 = tpu.concatenate %253, %254, %255, %256 in 0 : vector<4x61xf32>, vector<4x61xf32>, vector<4x61xf32>, vector<4x61xf32> -> vector<16x61xf32>
    %cst_96 = arith.constant dense<0.000000e+00> : vector<16x31xf32>
    %258 = tpu.matmul %257, %4, %cst_96 {dimension_numbers = #tpu.dot_dimension_numbers<[1], [0], [0], [1], [0, 0, 1, 1], [], []>} : vector<16x61xf32>, vector<61x31xf32>, vector<16x31xf32> -> vector<16x31xf32>
    %cst_97 = arith.constant dense<0.000000e+00> : vector<8x31xf32>
    %259 = tpu.matmul %0, %258, %cst_97 {dimension_numbers = #tpu.dot_dimension_numbers<[1], [0], [0], [1], [0, 0, 1, 1], [], []>} : vector<8x16xf32>, vector<16x31xf32>, vector<8x31xf32> -> vector<8x31xf32>
    %260 = vector.broadcast %1 : vector<8x1xf32> to vector<8x31xf32>
    %261 = arith.addf %259, %260 : vector<8x31xf32>
    %cst_98 = arith.constant 0.000000e+00 : f32
    %262 = vector.broadcast %cst_98 : f32 to vector<8x31xf32>
    %263 = arith.maximumf %261, %262 : vector<8x31xf32>
    %cst_99 = arith.constant 0.000000e+00 : f32
    %264 = vector.broadcast %cst_99 : f32 to vector<8x28xf32>
    %265 = vector.extract_strided_slice %2 {offsets = [0, 0, 0], sizes = [1, 8, 8], strides = [1, 1, 1]} : vector<4x8x8xf32> to vector<1x8x8xf32>
    %266 = vector.shape_cast %265 : vector<1x8x8xf32> to vector<8x8xf32>
    %267 = vector.extract_strided_slice %263 {offsets = [0, 0], sizes = [8, 28], strides = [1, 1]} : vector<8x31xf32> to vector<8x28xf32>
    %cst_100 = arith.constant dense<0.000000e+00> : vector<8x28xf32>
    %268 = tpu.matmul %266, %267, %cst_100 {dimension_numbers = #tpu.dot_dimension_numbers<[1], [0], [0], [1], [0, 0, 1, 1], [], []>} : vector<8x8xf32>, vector<8x28xf32>, vector<8x28xf32> -> vector<8x28xf32>
    %269 = arith.addf %264, %268 : vector<8x28xf32>
    %270 = vector.extract_strided_slice %2 {offsets = [1, 0, 0], sizes = [1, 8, 8], strides = [1, 1, 1]} : vector<4x8x8xf32> to vector<1x8x8xf32>
    %271 = vector.shape_cast %270 : vector<1x8x8xf32> to vector<8x8xf32>
    %272 = vector.extract_strided_slice %263 {offsets = [0, 1], sizes = [8, 28], strides = [1, 1]} : vector<8x31xf32> to vector<8x28xf32>
    %cst_101 = arith.constant dense<0.000000e+00> : vector<8x28xf32>
    %273 = tpu.matmul %271, %272, %cst_101 {dimension_numbers = #tpu.dot_dimension_numbers<[1], [0], [0], [1], [0, 0, 1, 1], [], []>} : vector<8x8xf32>, vector<8x28xf32>, vector<8x28xf32> -> vector<8x28xf32>
    %274 = arith.addf %269, %273 : vector<8x28xf32>
    %275 = vector.extract_strided_slice %2 {offsets = [2, 0, 0], sizes = [1, 8, 8], strides = [1, 1, 1]} : vector<4x8x8xf32> to vector<1x8x8xf32>
    %276 = vector.shape_cast %275 : vector<1x8x8xf32> to vector<8x8xf32>
    %277 = vector.extract_strided_slice %263 {offsets = [0, 2], sizes = [8, 28], strides = [1, 1]} : vector<8x31xf32> to vector<8x28xf32>
    %cst_102 = arith.constant dense<0.000000e+00> : vector<8x28xf32>
    %278 = tpu.matmul %276, %277, %cst_102 {dimension_numbers = #tpu.dot_dimension_numbers<[1], [0], [0], [1], [0, 0, 1, 1], [], []>} : vector<8x8xf32>, vector<8x28xf32>, vector<8x28xf32> -> vector<8x28xf32>
    %279 = arith.addf %274, %278 : vector<8x28xf32>
    %280 = vector.extract_strided_slice %2 {offsets = [3, 0, 0], sizes = [1, 8, 8], strides = [1, 1, 1]} : vector<4x8x8xf32> to vector<1x8x8xf32>
    %281 = vector.shape_cast %280 : vector<1x8x8xf32> to vector<8x8xf32>
    %282 = vector.extract_strided_slice %263 {offsets = [0, 3], sizes = [8, 28], strides = [1, 1]} : vector<8x31xf32> to vector<8x28xf32>
    %cst_103 = arith.constant dense<0.000000e+00> : vector<8x28xf32>
    %283 = tpu.matmul %281, %282, %cst_103 {dimension_numbers = #tpu.dot_dimension_numbers<[1], [0], [0], [1], [0, 0, 1, 1], [], []>} : vector<8x8xf32>, vector<8x28xf32>, vector<8x28xf32> -> vector<8x28xf32>
    %284 = arith.addf %279, %283 : vector<8x28xf32>
    %285 = vector.broadcast %3 : vector<8x1xf32> to vector<8x28xf32>
    %286 = arith.addf %284, %285 : vector<8x28xf32>
    %cst_104 = arith.constant 0.000000e+00 : f32
    %287 = vector.broadcast %cst_104 : f32 to vector<8x28xf32>
    %288 = arith.maximumf %286, %287 : vector<8x28xf32>
    %c6_105 = arith.constant 6 : index
    %c0_106 = arith.constant 0 : index
    %c0_107 = arith.constant 0 : index
    %289 = vector.load %arg7[%c6_105, %c0_106, %c0_107] : memref<8x8x28xf32, #tpu.memory_space<vmem>>, vector<1x8x28xf32>
    %290 = vector.shape_cast %289 : vector<1x8x28xf32> to vector<8x28xf32>
    %291 = vector.shape_cast %288 : vector<8x28xf32> to vector<1x8x28xf32>
    tpu.vector_store %arg7[%c6_105, %c0_106, %c0_107], %291 {strides = array<i32>} : memref<8x8x28xf32, #tpu.memory_space<vmem>>, vector<1x8x28xf32>,
    %c7 = arith.constant 7 : index
    %c0_108 = arith.constant 0 : index
    %c0_109 = arith.constant 0 : index
    %292 = vector.load %arg1[%c7, %c0_108, %c0_109] : memref<8x4x64xf32, #tpu.memory_space<vmem>>, vector<1x4x64xf32>
    %293 = vector.shape_cast %292 : vector<1x4x64xf32> to vector<4x64xf32>
    %294 = vector.extract_strided_slice %293 {offsets = [0, 0], sizes = [4, 61], strides = [1, 1]} : vector<4x64xf32> to vector<4x61xf32>
    %295 = vector.extract_strided_slice %293 {offsets = [0, 1], sizes = [4, 61], strides = [1, 1]} : vector<4x64xf32> to vector<4x61xf32>
    %296 = vector.extract_strided_slice %293 {offsets = [0, 2], sizes = [4, 61], strides = [1, 1]} : vector<4x64xf32> to vector<4x61xf32>
    %297 = vector.extract_strided_slice %293 {offsets = [0, 3], sizes = [4, 61], strides = [1, 1]} : vector<4x64xf32> to vector<4x61xf32>
    %298 = tpu.concatenate %294, %295, %296, %297 in 0 : vector<4x61xf32>, vector<4x61xf32>, vector<4x61xf32>, vector<4x61xf32> -> vector<16x61xf32>
    %cst_110 = arith.constant dense<0.000000e+00> : vector<16x31xf32>
    %299 = tpu.matmul %298, %4, %cst_110 {dimension_numbers = #tpu.dot_dimension_numbers<[1], [0], [0], [1], [0, 0, 1, 1], [], []>} : vector<16x61xf32>, vector<61x31xf32>, vector<16x31xf32> -> vector<16x31xf32>
    %cst_111 = arith.constant dense<0.000000e+00> : vector<8x31xf32>
    %300 = tpu.matmul %0, %299, %cst_111 {dimension_numbers = #tpu.dot_dimension_numbers<[1], [0], [0], [1], [0, 0, 1, 1], [], []>} : vector<8x16xf32>, vector<16x31xf32>, vector<8x31xf32> -> vector<8x31xf32>
    %301 = vector.broadcast %1 : vector<8x1xf32> to vector<8x31xf32>
    %302 = arith.addf %300, %301 : vector<8x31xf32>
    %cst_112 = arith.constant 0.000000e+00 : f32
    %303 = vector.broadcast %cst_112 : f32 to vector<8x31xf32>
    %304 = arith.maximumf %302, %303 : vector<8x31xf32>
    %cst_113 = arith.constant 0.000000e+00 : f32
    %305 = vector.broadcast %cst_113 : f32 to vector<8x28xf32>
    %306 = vector.extract_strided_slice %2 {offsets = [0, 0, 0], sizes = [1, 8, 8], strides = [1, 1, 1]} : vector<4x8x8xf32> to vector<1x8x8xf32>
    %307 = vector.shape_cast %306 : vector<1x8x8xf32> to vector<8x8xf32>
    %308 = vector.extract_strided_slice %304 {offsets = [0, 0], sizes = [8, 28], strides = [1, 1]} : vector<8x31xf32> to vector<8x28xf32>
    %cst_114 = arith.constant dense<0.000000e+00> : vector<8x28xf32>
    %309 = tpu.matmul %307, %308, %cst_114 {dimension_numbers = #tpu.dot_dimension_numbers<[1], [0], [0], [1], [0, 0, 1, 1], [], []>} : vector<8x8xf32>, vector<8x28xf32>, vector<8x28xf32> -> vector<8x28xf32>
    %310 = arith.addf %305, %309 : vector<8x28xf32>
    %311 = vector.extract_strided_slice %2 {offsets = [1, 0, 0], sizes = [1, 8, 8], strides = [1, 1, 1]} : vector<4x8x8xf32> to vector<1x8x8xf32>
    %312 = vector.shape_cast %311 : vector<1x8x8xf32> to vector<8x8xf32>
    %313 = vector.extract_strided_slice %304 {offsets = [0, 1], sizes = [8, 28], strides = [1, 1]} : vector<8x31xf32> to vector<8x28xf32>
    %cst_115 = arith.constant dense<0.000000e+00> : vector<8x28xf32>
    %314 = tpu.matmul %312, %313, %cst_115 {dimension_numbers = #tpu.dot_dimension_numbers<[1], [0], [0], [1], [0, 0, 1, 1], [], []>} : vector<8x8xf32>, vector<8x28xf32>, vector<8x28xf32> -> vector<8x28xf32>
    %315 = arith.addf %310, %314 : vector<8x28xf32>
    %316 = vector.extract_strided_slice %2 {offsets = [2, 0, 0], sizes = [1, 8, 8], strides = [1, 1, 1]} : vector<4x8x8xf32> to vector<1x8x8xf32>
    %317 = vector.shape_cast %316 : vector<1x8x8xf32> to vector<8x8xf32>
    %318 = vector.extract_strided_slice %304 {offsets = [0, 2], sizes = [8, 28], strides = [1, 1]} : vector<8x31xf32> to vector<8x28xf32>
    %cst_116 = arith.constant dense<0.000000e+00> : vector<8x28xf32>
    %319 = tpu.matmul %317, %318, %cst_116 {dimension_numbers = #tpu.dot_dimension_numbers<[1], [0], [0], [1], [0, 0, 1, 1], [], []>} : vector<8x8xf32>, vector<8x28xf32>, vector<8x28xf32> -> vector<8x28xf32>
    %320 = arith.addf %315, %319 : vector<8x28xf32>
    %321 = vector.extract_strided_slice %2 {offsets = [3, 0, 0], sizes = [1, 8, 8], strides = [1, 1, 1]} : vector<4x8x8xf32> to vector<1x8x8xf32>
    %322 = vector.shape_cast %321 : vector<1x8x8xf32> to vector<8x8xf32>
    %323 = vector.extract_strided_slice %304 {offsets = [0, 3], sizes = [8, 28], strides = [1, 1]} : vector<8x31xf32> to vector<8x28xf32>
    %cst_117 = arith.constant dense<0.000000e+00> : vector<8x28xf32>
    %324 = tpu.matmul %322, %323, %cst_117 {dimension_numbers = #tpu.dot_dimension_numbers<[1], [0], [0], [1], [0, 0, 1, 1], [], []>} : vector<8x8xf32>, vector<8x28xf32>, vector<8x28xf32> -> vector<8x28xf32>
    %325 = arith.addf %320, %324 : vector<8x28xf32>
    %326 = vector.broadcast %3 : vector<8x1xf32> to vector<8x28xf32>
    %327 = arith.addf %325, %326 : vector<8x28xf32>
    %cst_118 = arith.constant 0.000000e+00 : f32
    %328 = vector.broadcast %cst_118 : f32 to vector<8x28xf32>
    %329 = arith.maximumf %327, %328 : vector<8x28xf32>
    %c7_119 = arith.constant 7 : index
    %c0_120 = arith.constant 0 : index
    %c0_121 = arith.constant 0 : index
    %330 = vector.load %arg7[%c7_119, %c0_120, %c0_121] : memref<8x8x28xf32, #tpu.memory_space<vmem>>, vector<1x8x28xf32>
    %331 = vector.shape_cast %330 : vector<1x8x28xf32> to vector<8x28xf32>
    %332 = vector.shape_cast %329 : vector<8x28xf32> to vector<1x8x28xf32>
    tpu.vector_store %arg7[%c7_119, %c0_120, %c0_121], %332 {strides = array<i32>} : memref<8x8x28xf32, #tpu.memory_space<vmem>>, vector<1x8x28xf32>,
    return
  }
  func.func @transform_0(%arg0: i32) -> (i32, i32, i32) {
    %c0_i32 = arith.constant 0 : i32
    %c0_i32_0 = arith.constant 0 : i32
    %c0_i32_1 = arith.constant 0 : i32
    return %arg0, %c0_i32, %c0_i32_0 : i32, i32, i32
  }
  func.func @transform_1(%arg0: i32) -> (i32, i32) {
    %c0_i32 = arith.constant 0 : i32
    %c0_i32_0 = arith.constant 0 : i32
    %c0_i32_1 = arith.constant 0 : i32
    return %c0_i32, %c0_i32_0 : i32, i32
  }
  func.func @transform_2(%arg0: i32) -> (i32, i32) {
    %c0_i32 = arith.constant 0 : i32
    %c0_i32_0 = arith.constant 0 : i32
    %c0_i32_1 = arith.constant 0 : i32
    return %c0_i32, %c0_i32_0 : i32, i32
  }
  func.func @transform_3(%arg0: i32) -> (i32, i32, i32) {
    %c0_i32 = arith.constant 0 : i32
    %c0_i32_0 = arith.constant 0 : i32
    %c0_i32_1 = arith.constant 0 : i32
    %c0_i32_2 = arith.constant 0 : i32
    return %c0_i32, %c0_i32_0, %c0_i32_1 : i32, i32, i32
  }
  func.func @transform_4(%arg0: i32) -> (i32, i32) {
    %c0_i32 = arith.constant 0 : i32
    %c0_i32_0 = arith.constant 0 : i32
    %c0_i32_1 = arith.constant 0 : i32
    return %c0_i32, %c0_i32_0 : i32, i32
  }
  func.func @transform_5(%arg0: i32) -> (i32, i32) {
    %c0_i32 = arith.constant 0 : i32
    %c0_i32_0 = arith.constant 0 : i32
    %c0_i32_1 = arith.constant 0 : i32
    return %c0_i32, %c0_i32_0 : i32, i32
  }
  func.func @transform_6(%arg0: i32) -> (i32, i32, i32) {
    %c0_i32 = arith.constant 0 : i32
    %c0_i32_0 = arith.constant 0 : i32
    %c0_i32_1 = arith.constant 0 : i32
    return %arg0, %c0_i32, %c0_i32_0 : i32, i32, i32
  }
}

</mosaic_0001>

<llo_original>
// kernel: tpu_custom_call.1
$region0: #{tpu_custom_call.1}
  #allocation0 [shape = 'u32[]', space=smem, size = 0x4, offset = 0x4, fixed_abs, tag = 'smem constant byte address 0x4 - core index']
  #allocation1 [shape = 'u32[72,128]{1,0:T(1,128)}', space=vmem, size = 0x9000, scoped, tag = 'internal scratch']
  %s0 = inlined_call_operand.vmem [shape: f32[16,4,64], index: 0, kind: input, shape index: {}]
  %s1 = inlined_call_operand.vmem [shape: f32[8,16], index: 1, kind: input, shape index: {}]
  %s2 = inlined_call_operand.vmem [shape: f32[8,1], index: 2, kind: input, shape index: {}]
  %s3 = inlined_call_operand.vmem [shape: f32[4,8,8], index: 3, kind: input, shape index: {}]
  %s4 = inlined_call_operand.vmem [shape: f32[8,1], index: 4, kind: input, shape index: {}]
  %s5 = inlined_call_operand.vmem [shape: f32[61,31], index: 5, kind: input, shape index: {}]
  %s6 = inlined_call_operand.hbm [shape: f32[16,8,28], index: 6, kind: output, shape index: {}]
  %s7 = sld [smem:[#allocation0]]
  $region57: #{tpu_custom_call.1} parent=0
    _
  %s9 = ssub.s32 1, %s7
  %s10 = scalar_select 0, %s9, %s7
  $region1: #{tpu_custom_call.1} parent=0
    #allocation2 [shape = 'u8[65536]{0}', space=vmem, size = 0x10000, scoped, tag = 'output window, operand 0']
    #allocation3 [shape = 's32[2]{0}', space=sflag, size = 0x8, scoped, tag = 'scoped memory for tpu_custom_call.1']
    %11 = vsyncpa [#allocation3], 0
    %s12 = scalar_lea.sflag [#allocation3], 1
    %13 = vsyncpa %s12, 0
    loop: start=0, step=1, limit=4
    $region2: #{tpu_custom_call.1} parent=1 // loop_pre_header
      _
    $region3: #{tpu_custom_call.1} parent=1 // loop_header
      %s15 = sphi 0, %s19
      %p16 = scmp.ge.s32.totalorder %s15, 4
      %s25 = sphi 0, %s27
      %s28 = sphi 0, %s25
      %s29 = sphi 0, %s28
      %s45 = sphi 0, %s29
      %s49 = sphi 0, %s49
      %s51 = sphi 0, %s49
      %s52 = sphi 0, %s51
      %s66 = sphi 0, %s52
      %s70 = sphi 0, %s70
      %s72 = sphi 0, %s70
      %s73 = sphi 0, %s72
      %s87 = sphi 0, %s73
      %s91 = sphi 0, %s91
      %s93 = sphi 0, %s91
      %s94 = sphi 0, %s93
      %s108 = sphi 0, %s94
      %s112 = sphi 0, %s112
      %s114 = sphi 0, %s112
      %s115 = sphi 0, %s114
      %s129 = sphi 0, %s115
      %s133 = sphi 0, %s133
      %s135 = sphi 0, %s133
      %s136 = sphi 0, %s135
      %s150 = sphi 0, %s136
      %s156 = sphi 0, %s158
      %s159 = sphi 0, %s156
      %s160 = sphi 0, %s159
      %s176 = sphi 0, %s160
    $region4: #{tpu_custom_call.1} parent=1 // loop_header_branch
      %18 = sbr.rel (%p16) target = $region8
    $region5: #{tpu_custom_call.1} parent=1 // loop_body
      %s20 = ssub.s32 %s15, 1
      %s21 = ssub.s32 %s15, 2
      %s22 = sadd.s32 %s15, 1
      %s23 = ssub.s32 %s15, %s22
      %p24 = scmp.eq.s32.totalorder %s23, 0
      %s26 = sadd.s32 %s25, 1
      %s27 = scalar_select %p24, %s25, %s26
      %p30 = pneg %p24
      %p31 = scmp.eq.s32.totalorder %s15, 1
      %p32 = por %p30, %p31
      %p33 = scmp.ne.s32.totalorder %s25, %s28
      %p34 = scmp.eq.s32.totalorder %s15, 0
      %p35 = por %p33, %p34
      %p36 = scmp.ne.s32.totalorder %s25, %s28
      %p37 = scmp.eq.s32.totalorder %s20, 1
      %p38 = por %p36, %p37
      %p39 = scmp.ne.s32.totalorder %s28, %s29
      %p40 = scmp.eq.s32.totalorder %s20, 0
      %p41 = por %p39, %p40
      %p42 = scmp.ne.s32.totalorder %s28, %s29
      %p43 = scmp.eq.s32.totalorder %s21, 1
      %p44 = por %p42, %p43
      %p46 = scmp.ne.s32.totalorder %s29, %s45
      %p47 = scmp.eq.s32.totalorder %s21, 0
      %p48 = por %p46, %p47
      %s50 = sadd.s32 %s49, 1
      %p53 = scmp.eq.s32.totalorder %s15, 1
      %p54 = scmp.ne.s32.totalorder %s49, %s51
      %p55 = scmp.eq.s32.totalorder %s15, 0
      %p56 = por %p54, %p55
      %p57 = scmp.ne.s32.totalorder %s49, %s51
      %p58 = scmp.eq.s32.totalorder %s20, 1
      %p59 = por %p57, %p58
      %p60 = scmp.ne.s32.totalorder %s51, %s52
      %p61 = scmp.eq.s32.totalorder %s20, 0
      %p62 = por %p60, %p61
      %p63 = scmp.ne.s32.totalorder %s51, %s52
      %p64 = scmp.eq.s32.totalorder %s21, 1
      %p65 = por %p63, %p64
      %p67 = scmp.ne.s32.totalorder %s52, %s66
      %p68 = scmp.eq.s32.totalorder %s21, 0
      %p69 = por %p67, %p68
      %s71 = sadd.s32 %s70, 1
      %p74 = scmp.eq.s32.totalorder %s15, 1
      %p75 = scmp.ne.s32.totalorder %s70, %s72
      %p76 = scmp.eq.s32.totalorder %s15, 0
      %p77 = por %p75, %p76
      %p78 = scmp.ne.s32.totalorder %s70, %s72
      %p79 = scmp.eq.s32.totalorder %s20, 1
      %p80 = por %p78, %p79
      %p81 = scmp.ne.s32.totalorder %s72, %s73
      %p82 = scmp.eq.s32.totalorder %s20, 0
      %p83 = por %p81, %p82
      %p84 = scmp.ne.s32.totalorder %s72, %s73
      %p85 = scmp.eq.s32.totalorder %s21, 1
      %p86 = por %p84, %p85
      %p88 = scmp.ne.s32.totalorder %s73, %s87
      %p89 = scmp.eq.s32.totalorder %s21, 0
      %p90 = por %p88, %p89
      %s92 = sadd.s32 %s91, 1
      %p95 = scmp.eq.s32.totalorder %s15, 1
      %p96 = scmp.ne.s32.totalorder %s91, %s93
      %p97 = scmp.eq.s32.totalorder %s15, 0
      %p98 = por %p96, %p97
      %p99 = scmp.ne.s32.totalorder %s91, %s93
      %p100 = scmp.eq.s32.totalorder %s20, 1
      %p101 = por %p99, %p100
      %p102 = scmp.ne.s32.totalorder %s93, %s94
      %p103 = scmp.eq.s32.totalorder %s20, 0
      %p104 = por %p102, %p103
      %p105 = scmp.ne.s32.totalorder %s93, %s94
      %p106 = scmp.eq.s32.totalorder %s21, 1
      %p107 = por %p105, %p106
      %p109 = scmp.ne.s32.totalorder %s94, %s108
      %p110 = scmp.eq.s32.totalorder %s21, 0
      %p111 = por %p109, %p110
      %s113 = sadd.s32 %s112, 1
      %p116 = scmp.eq.s32.totalorder %s15, 1
      %p117 = scmp.ne.s32.totalorder %s112, %s114
      %p118 = scmp.eq.s32.totalorder %s15, 0
      %p119 = por %p117, %p118
      %p120 = scmp.ne.s32.totalorder %s112, %s114
      %p121 = scmp.eq.s32.totalorder %s20, 1
      %p122 = por %p120, %p121
      %p123 = scmp.ne.s32.totalorder %s114, %s115
      %p124 = scmp.eq.s32.totalorder %s20, 0
      %p125 = por %p123, %p124
      %p126 = scmp.ne.s32.totalorder %s114, %s115
      %p127 = scmp.eq.s32.totalorder %s21, 1
      %p128 = por %p126, %p127
      %p130 = scmp.ne.s32.totalorder %s115, %s129
      %p131 = scmp.eq.s32.totalorder %s21, 0
      %p132 = por %p130, %p131
      %s134 = sadd.s32 %s133, 1
      %p137 = scmp.eq.s32.totalorder %s15, 1
      %p138 = scmp.ne.s32.totalorder %s133, %s135
      %p139 = scmp.eq.s32.totalorder %s15, 0
      %p140 = por %p138, %p139
      %p141 = scmp.ne.s32.totalorder %s133, %s135
      %p142 = scmp.eq.s32.totalorder %s20, 1
      %p143 = por %p141, %p142
      %p144 = scmp.ne.s32.totalorder %s135, %s136
      %p145 = scmp.eq.s32.totalorder %s20, 0
      %p146 = por %p144, %p145
      %p147 = scmp.ne.s32.totalorder %s135, %s136
      %p148 = scmp.eq.s32.totalorder %s21, 1
      %p149 = por %p147, %p148
      %p151 = scmp.ne.s32.totalorder %s136, %s150
      %p152 = scmp.eq.s32.totalorder %s21, 0
      %p153 = por %p151, %p152
      %s154 = ssub.s32 %s15, %s22
      %p155 = scmp.eq.s32.totalorder %s154, 0
      %s157 = sadd.s32 %s156, 1
      %s158 = scalar_select %p155, %s156, %s157
      %p161 = pneg %p155
      %p162 = scmp.eq.s32.totalorder %s15, 1
      %p163 = por %p161, %p162
      %p164 = scmp.ne.s32.totalorder %s156, %s159
      %p165 = scmp.eq.s32.totalorder %s15, 0
      %p166 = por %p164, %p165
      %p167 = scmp.ne.s32.totalorder %s156, %s159
      %p168 = scmp.eq.s32.totalorder %s20, 1
      %p169 = por %p167, %p168
      %p170 = scmp.ne.s32.totalorder %s159, %s160
      %p171 = scmp.eq.s32.totalorder %s20, 0
      %p172 = por %p170, %p171
      %p173 = scmp.ne.s32.totalorder %s159, %s160
      %p174 = scmp.eq.s32.totalorder %s21, 1
      %p175 = por %p173, %p174
      %p177 = scmp.ne.s32.totalorder %s160, %s176
      %p178 = scmp.eq.s32.totalorder %s21, 0
      %p179 = por %p177, %p178
      %p180 = scmp.le.s32.totalorder 1, %s15
      %p181 = scmp.lt.s32.totalorder %s15, 3
      %p182 = pnand %p180, %p181
      %p183 = pneg %p182
      // Predicated region
      $region9: #{tpu_custom_call.1} parent=5 // pred_check
        _
      $region10: #{tpu_custom_call.1} parent=5 // pred_check_branch
        %185 = sbr.rel (%p182) target = $region12
      $region11: #{tpu_custom_call.1} parent=5 // pred_region
        %s186 = ssub.s32 %s15, 1
        // Predicated region
        $region13: #{tpu_custom_call.1} parent=11 // pred_check
          %p187 = pneg %p62
        $region14: #{tpu_custom_call.1} parent=11 // pred_check_branch
          %189 = sbr.rel (%p187) target = $region16
        $region15: #{tpu_custom_call.1} parent=11 // pred_region
          _
        $region16: #{tpu_custom_call.1} parent=11 // pred_fallthru
          _
        // Predicated region
        $region17: #{tpu_custom_call.1} parent=11 // pred_check
          %p190 = pneg %p83
        $region18: #{tpu_custom_call.1} parent=11 // pred_check_branch
          %192 = sbr.rel (%p190) target = $region20
        $region19: #{tpu_custom_call.1} parent=11 // pred_region
          _
        $region20: #{tpu_custom_call.1} parent=11 // pred_fallthru
          _
        // Predicated region
        $region21: #{tpu_custom_call.1} parent=11 // pred_check
          %p193 = pneg %p104
        $region22: #{tpu_custom_call.1} parent=11 // pred_check_branch
          %195 = sbr.rel (%p193) target = $region24
        $region23: #{tpu_custom_call.1} parent=11 // pred_region
          _
        $region24: #{tpu_custom_call.1} parent=11 // pred_fallthru
          _
        // Predicated region
        $region25: #{tpu_custom_call.1} parent=11 // pred_check
          %p196 = pneg %p125
        $region26: #{tpu_custom_call.1} parent=11 // pred_check_branch
          %198 = sbr.rel (%p196) target = $region28
        $region27: #{tpu_custom_call.1} parent=11 // pred_region
          _
        $region28: #{tpu_custom_call.1} parent=11 // pred_fallthru
          _
        // Predicated region
        $region29: #{tpu_custom_call.1} parent=11 // pred_check
          %p199 = pneg %p146
        $region30: #{tpu_custom_call.1} parent=11 // pred_check_branch
          %201 = sbr.rel (%p199) target = $region32
        $region31: #{tpu_custom_call.1} parent=11 // pred_region
          _
        $region32: #{tpu_custom_call.1} parent=11 // pred_fallthru
          _
      $region12: #{tpu_custom_call.1} parent=5 // pred_fallthru
        _
      %p202 = scmp.lt.s32.totalorder %s15, 2
      // Predicated region
      $region33: #{tpu_custom_call.1} parent=5 // pred_check
        %p203 = pneg %p202
      $region34: #{tpu_custom_call.1} parent=5 // pred_check_branch
        %205 = sbr.rel (%p203) target = $region36
      $region35: #{tpu_custom_call.1} parent=5 // pred_region
        // Predicated region
        $region37: #{tpu_custom_call.1} parent=35 // pred_check
          %p206 = pneg %p35
        $region38: #{tpu_custom_call.1} parent=35 // pred_check_branch
          %208 = sbr.rel (%p206) target = $region40
        $region39: #{tpu_custom_call.1} parent=35 // pred_region
          %s209 = smul.u32 8, %s15
          %p210 = scmp.lt.s32.totalorder %s209, 15
          %s211 = scalar_select %p210, %s209, 15
          %s212 = smul.addr %s211, 4
          %s213 = scalar_lea.vmem %s0, %s212
          %s214 = smul.u32 8, %s15
        $region40: #{tpu_custom_call.1} parent=35 // pred_fallthru
          _
      $region36: #{tpu_custom_call.1} parent=5 // pred_fallthru
        _
      %p215 = scmp.le.s32.totalorder 1, %s15
      %p216 = scmp.lt.s32.totalorder %s15, 3
      %p217 = pnand %p215, %p216
      %p218 = pneg %p217
      // Predicated region
      $region41: #{tpu_custom_call.1} parent=5 // pred_check
        _
      $region42: #{tpu_custom_call.1} parent=5 // pred_check_branch
        %220 = sbr.rel (%p217) target = $region44
      $region43: #{tpu_custom_call.1} parent=5 // pred_region
        %s221 = ssub.s32 %s15, 1
        %s222 = smul.u32 8, %s20
        %p223 = scmp.lt.s32.totalorder %s222, 15
        %s224 = scalar_select %p223, %s222, 15
        %s225 = smul.addr %s224, 4
        %s226 = scalar_lea.vmem %s0, %s225
        %p227 = pneg %p41
        %p228 = pneg %p38
        %p229 = pneg %p62
        %p230 = pneg %p59
        %p231 = pneg %p83
        %p232 = pneg %p80
        %p233 = pneg %p104
        %p234 = pneg %p101
        %p235 = pneg %p125
        %p236 = pneg %p122
        %p237 = pneg %p146
        %p238 = pneg %p143
        %p239 = pneg %p172
        %p240 = pneg %p169
        %s241 = sand.u32 %s159, 1
        %s242 = scalar_lea.sflag [#allocation3], %s241
        %s243 = sand.u32 %s159, 1
        %s244 = smul.addr %s243, 64
        %s245 = scalar_lea.vmem [#allocation2], %s244
        %s246 = smul.u32 8, %s20
        %p247 = scmp.lt.s32.totalorder %s246, 15
        %s248 = scalar_select %p247, %s246, 15
        %s249 = smul.addr %s248, 4
        %s250 = scalar_lea.vmem %s0, %s249
        %s251 = smul.u32 8, %s20
        %s252 = smul.u32 8, %s20
        %v253 = vld [vmem:[%s1] sm:$0xff]
        %v254 = vld [vmem:[%s2] sm:$0xff]
        %v255 = vld [vmem:[%s3] sm:$0xff]
        %v256 = vld [vmem:[%s3 + $0x8] sm:$0xff]
        %v257 = vld [vmem:[%s3 + $0x10] sm:$0xff]
        %v258 = vld [vmem:[%s3 + $0x18] sm:$0xff]
        %v259 = vld [vmem:[%s4] sm:$0xff]
        %v260 = vld [vmem:[%s5] sm:$0xff]
        %v261 = vld [vmem:[%s5 + $0x8] sm:$0xff]
        %v262 = vld [vmem:[%s5 + $0x10] sm:$0xff]
        %v263 = vld [vmem:[%s5 + $0x18] sm:$0xff]
        %v264 = vld [vmem:[%s5 + $0x20] sm:$0xff]
        %v265 = vld [vmem:[%s5 + $0x28] sm:$0xff]
        %v266 = vld [vmem:[%s5 + $0x30] sm:$0xff]
        %v267 = vld [vmem:[%s5 + $0x38] sm:$0x1f]
        %v268 = vld [vmem:[%s250] sm:$0xf]
        %v270 = vrot.slane %v268, 4
        %271 = vrot.lane.b32.xlu0 %v270, 127
        %v272 = vpop.permute.xlu0 %271
        %274 = vrot.lane.b32.xlu0 %v268, 126
        %v275 = vpop.permute.xlu0 %274
        %277 = vrot.lane.b32.xlu0 %v270, 125
        %v278 = vpop.permute.xlu0 %277
        %vm280 = vcmask 1043456
        %v281 = vsel %vm280, %v268, %v272
        %v282 = vsel %vm280, %v275, %v278
        %vm283 = vcmask 498688
        %v285 = vsel %vm283, %v281, 0
        %v288 = vsel %vm283, %v282, 0
        %vm290 = vcmask 1044480
        %v292 = vsel %vm290, %v267, 0
        %294 = vmatpush.msra.mxu0 0.0
        %295 = vmatpush.msra.mxu0 0.0
        %296 = vmatpush.msra.mxu0 0.0
        %297 = vmatpush.msra.mxu0 0.0
        %298 = vmatpush.msra.mxu0 0.0
        %299 = vmatpush.msra.mxu0 0.0
        %300 = vmatpush.msra.mxu0 0.0
        %301 = vmatpush.msra.mxu0 0.0
        %302 = vmatpush.msra.mxu0 %v292
        %303 = vmatpush.msra.mxu0 %v266
        %304 = vmatpush.msra.mxu0 %v265
        %305 = vmatpush.msra.mxu0 %v264
        %306 = vmatpush.msra.mxu0 %v263
        %307 = vmatpush.msra.mxu0 %v262
        %308 = vmatpush.msra.mxu0 %v261
        %309 = vmatpush.msra.mxu0 %v260
        %310 = vmatmul.f32.gmra.mxu0 %v285
        %v311 = vpop.f32.mrf.mxu0
        %v312 = vadd.f32 0.0, %v311
        %313 = vmatmul.f32.gmra.mxu0 %v288
        %v314 = vpop.f32.mrf.mxu0
        %v315 = vadd.f32 0.0, %v314
        %316 = vdwg.mxu0
        %318 = vset.pattern.permute.xlu0 0
        %319 = vperm.xlu0 %318, %v254
        %v320 = vpop.permute.xlu0 %319
        %vm322 = vcmask 130048
        %v324 = vsel %vm322, %v253, 0
        %326 = vmatpush.msra.mxu0 0.0
        %327 = vmatpush.msra.mxu0 0.0
        %328 = vmatpush.msra.mxu0 0.0
        %329 = vmatpush.msra.mxu0 0.0
        %330 = vmatpush.msra.mxu0 0.0
        %331 = vmatpush.msra.mxu0 0.0
        %332 = vmatpush.msra.mxu0 0.0
        %333 = vmatpush.msra.mxu0 0.0
        %334 = vmatpush.msra.mxu0 0.0
        %335 = vmatpush.msra.mxu0 0.0
        %336 = vmatpush.msra.mxu0 0.0
        %337 = vmatpush.msra.mxu0 0.0
        %338 = vmatpush.msra.mxu0 0.0
        %339 = vmatpush.msra.mxu0 0.0
        %340 = vmatpush.msra.mxu0 %v315
        %341 = vmatpush.msra.mxu0 %v312
        %342 = vmatmul.f32.gmra.mxu0 %v324
        %v343 = vpop.f32.mrf.mxu0
        %v344 = vadd.f32 %v320, %v343
        %345 = vdwg.mxu0
        %v346 = vmax.f32 %v344, 0.0
        %348 = vrot.lane.b32.xlu0 %v346, 127
        %v349 = vpop.permute.xlu0 %348
        %vm351 = vcmask 64512
        %v353 = vsel %vm351, %v256, 0
        %355 = vmatpush.msra.mxu0 0.0
        %356 = vmatpush.msra.mxu0 0.0
        %357 = vmatpush.msra.mxu0 0.0
        %358 = vmatpush.msra.mxu0 0.0
        %359 = vmatpush.msra.mxu0 0.0
        %360 = vmatpush.msra.mxu0 0.0
        %361 = vmatpush.msra.mxu0 0.0
        %362 = vmatpush.msra.mxu0 0.0
        %363 = vmatpush.msra.mxu0 0.0
        %364 = vmatpush.msra.mxu0 0.0
        %365 = vmatpush.msra.mxu0 0.0
        %366 = vmatpush.msra.mxu0 0.0
        %367 = vmatpush.msra.mxu0 0.0
        %368 = vmatpush.msra.mxu0 0.0
        %369 = vmatpush.msra.mxu0 0.0
        %370 = vmatpush.msra.mxu0 %v349
        %371 = vmatmul.f32.gmra.mxu0 %v353
        %v372 = vpop.f32.mrf.mxu0
        %v373 = vadd.f32 0.0, %v372
        %374 = vdwg.mxu0
        %v376 = vsel %vm351, %v255, 0
        %378 = vmatpush.msra.mxu0 0.0
        %379 = vmatpush.msra.mxu0 0.0
        %380 = vmatpush.msra.mxu0 0.0
        %381 = vmatpush.msra.mxu0 0.0
        %382 = vmatpush.msra.mxu0 0.0
        %383 = vmatpush.msra.mxu0 0.0
        %384 = vmatpush.msra.mxu0 0.0
        %385 = vmatpush.msra.mxu0 0.0
        %386 = vmatpush.msra.mxu0 0.0
        %387 = vmatpush.msra.mxu0 0.0
        %388 = vmatpush.msra.mxu0 0.0
        %389 = vmatpush.msra.mxu0 0.0
        %390 = vmatpush.msra.mxu0 0.0
        %391 = vmatpush.msra.mxu0 0.0
        %392 = vmatpush.msra.mxu0 0.0
        %393 = vmatpush.msra.mxu0 %v346
        %394 = vmatmul.f32.gmra.mxu0 %v376
        %v395 = vpop.f32.mrf.mxu0
        %v396 = vadd.f32 %v373, %v395
        %397 = vdwg.mxu0
        %398 = vrot.lane.b32.xlu0 %v346, 126
        %v399 = vpop.permute.xlu0 %398
        %v402 = vsel %vm351, %v257, 0
        %404 = vmatpush.msra.mxu0 0.0
        %405 = vmatpush.msra.mxu0 0.0
        %406 = vmatpush.msra.mxu0 0.0
        %407 = vmatpush.msra.mxu0 0.0
        %408 = vmatpush.msra.mxu0 0.0
        %409 = vmatpush.msra.mxu0 0.0
        %410 = vmatpush.msra.mxu0 0.0
        %411 = vmatpush.msra.mxu0 0.0
        %412 = vmatpush.msra.mxu0 0.0
        %413 = vmatpush.msra.mxu0 0.0
        %414 = vmatpush.msra.mxu0 0.0
        %415 = vmatpush.msra.mxu0 0.0
        %416 = vmatpush.msra.mxu0 0.0
        %417 = vmatpush.msra.mxu0 0.0
        %418 = vmatpush.msra.mxu0 0.0
        %419 = vmatpush.msra.mxu0 %v399
        %420 = vmatmul.f32.gmra.mxu0 %v402
        %v421 = vpop.f32.mrf.mxu0
        %v422 = vadd.f32 0.0, %v421
        %423 = vdwg.mxu0
        %v424 = vadd.f32 %v396, %v422
        %425 = vrot.lane.b32.xlu0 %v346, 125
        %v426 = vpop.permute.xlu0 %425
        %v429 = vsel %vm351, %v258, 0
        %431 = vmatpush.msra.mxu0 0.0
        %432 = vmatpush.msra.mxu0 0.0
        %433 = vmatpush.msra.mxu0 0.0
        %434 = vmatpush.msra.mxu0 0.0
        %435 = vmatpush.msra.mxu0 0.0
        %436 = vmatpush.msra.mxu0 0.0
        %437 = vmatpush.msra.mxu0 0.0
        %438 = vmatpush.msra.mxu0 0.0
        %439 = vmatpush.msra.mxu0 0.0
        %440 = vmatpush.msra.mxu0 0.0
        %441 = vmatpush.msra.mxu0 0.0
        %442 = vmatpush.msra.mxu0 0.0
        %443 = vmatpush.msra.mxu0 0.0
        %444 = vmatpush.msra.mxu0 0.0
        %445 = vmatpush.msra.mxu0 0.0
        %446 = vmatpush.msra.mxu0 %v426
        %447 = vmatmul.f32.gmra.mxu0 %v429
        %v448 = vpop.f32.mrf.mxu0
        %v449 = vadd.f32 0.0, %v448
        %450 = vdwg.mxu0
        %v451 = vadd.f32 %v424, %v449
        %453 = vset.pattern.permute.xlu0 0
        %454 = vperm.xlu0 %453, %v259
        %v455 = vpop.permute.xlu0 %454
        %v457 = vadd.f32 %v451, %v455
        %v458 = vmax.f32 %v457, 0.0
        %vm459 = vcmask 228352
        %460 = vst.msk [vmem:[%s245] sm:$0xff] %vm459, %v458
        %s461 = scalar_lea.vmem %s250, 4
        %v462 = vld [vmem:[%s461] sm:$0xf]
        %v464 = vrot.slane %v462, 4
        %465 = vrot.lane.b32.xlu0 %v464, 127
        %v466 = vpop.permute.xlu0 %465
        %468 = vrot.lane.b32.xlu0 %v462, 126
        %v469 = vpop.permute.xlu0 %468
        %471 = vrot.lane.b32.xlu0 %v464, 125
        %v472 = vpop.permute.xlu0 %471
        %v474 = vsel %vm280, %v462, %v466
        %v475 = vsel %vm280, %v469, %v472
        %v477 = vsel %vm283, %v474, 0
        %v480 = vsel %vm283, %v475, 0
        %482 = vmatpush.msra.mxu0 0.0
        %483 = vmatpush.msra.mxu0 0.0
        %484 = vmatpush.msra.mxu0 0.0
        %485 = vmatpush.msra.mxu0 0.0
        %486 = vmatpush.msra.mxu0 0.0
        %487 = vmatpush.msra.mxu0 0.0
        %488 = vmatpush.msra.mxu0 0.0
        %489 = vmatpush.msra.mxu0 0.0
        %490 = vmatpush.msra.mxu0 %v292
        %491 = vmatpush.msra.mxu0 %v266
        %492 = vmatpush.msra.mxu0 %v265
        %493 = vmatpush.msra.mxu0 %v264
        %494 = vmatpush.msra.mxu0 %v263
        %495 = vmatpush.msra.mxu0 %v262
        %496 = vmatpush.msra.mxu0 %v261
        %497 = vmatpush.msra.mxu0 %v260
        %498 = vmatmul.f32.gmra.mxu0 %v477
        %v499 = vpop.f32.mrf.mxu0
        %v500 = vadd.f32 0.0, %v499
        %501 = vmatmul.f32.gmra.mxu0 %v480
        %v502 = vpop.f32.mrf.mxu0
        %v503 = vadd.f32 0.0, %v502
        %504 = vdwg.mxu0
        %505 = vmatpush.msra.mxu0 0.0
        %506 = vmatpush.msra.mxu0 0.0
        %507 = vmatpush.msra.mxu0 0.0
        %508 = vmatpush.msra.mxu0 0.0
        %509 = vmatpush.msra.mxu0 0.0
        %510 = vmatpush.msra.mxu0 0.0
        %511 = vmatpush.msra.mxu0 0.0
        %512 = vmatpush.msra.mxu0 0.0
        %513 = vmatpush.msra.mxu0 0.0
        %514 = vmatpush.msra.mxu0 0.0
        %515 = vmatpush.msra.mxu0 0.0
        %516 = vmatpush.msra.mxu0 0.0
        %517 = vmatpush.msra.mxu0 0.0
        %518 = vmatpush.msra.mxu0 0.0
        %519 = vmatpush.msra.mxu0 %v503
        %520 = vmatpush.msra.mxu0 %v500
        %521 = vmatmul.f32.gmra.mxu0 %v324
        %v522 = vpop.f32.mrf.mxu0
        %v523 = vadd.f32 %v320, %v522
        %524 = vdwg.mxu0
        %v525 = vmax.f32 %v523, 0.0
        %527 = vrot.lane.b32.xlu0 %v525, 127
        %v528 = vpop.permute.xlu0 %527
        %530 = vmatpush.msra.mxu0 0.0
        %531 = vmatpush.msra.mxu0 0.0
        %532 = vmatpush.msra.mxu0 0.0
        %533 = vmatpush.msra.mxu0 0.0
        %534 = vmatpush.msra.mxu0 0.0
        %535 = vmatpush.msra.mxu0 0.0
        %536 = vmatpush.msra.mxu0 0.0
        %537 = vmatpush.msra.mxu0 0.0
        %538 = vmatpush.msra.mxu0 0.0
        %539 = vmatpush.msra.mxu0 0.0
        %540 = vmatpush.msra.mxu0 0.0
        %541 = vmatpush.msra.mxu0 0.0
        %542 = vmatpush.msra.mxu0 0.0
        %543 = vmatpush.msra.mxu0 0.0
        %544 = vmatpush.msra.mxu0 0.0
        %545 = vmatpush.msra.mxu0 %v528
        %546 = vmatmul.f32.gmra.mxu0 %v353
        %v547 = vpop.f32.mrf.mxu0
        %v548 = vadd.f32 0.0, %v547
        %549 = vdwg.mxu0
        %550 = vmatpush.msra.mxu0 0.0
        %551 = vmatpush.msra.mxu0 0.0
        %552 = vmatpush.msra.mxu0 0.0
        %553 = vmatpush.msra.mxu0 0.0
        %554 = vmatpush.msra.mxu0 0.0
        %555 = vmatpush.msra.mxu0 0.0
        %556 = vmatpush.msra.mxu0 0.0
        %557 = vmatpush.msra.mxu0 0.0
        %558 = vmatpush.msra.mxu0 0.0
        %559 = vmatpush.msra.mxu0 0.0
        %560 = vmatpush.msra.mxu0 0.0
        %561 = vmatpush.msra.mxu0 0.0
        %562 = vmatpush.msra.mxu0 0.0
        %563 = vmatpush.msra.mxu0 0.0
        %564 = vmatpush.msra.mxu0 0.0
        %565 = vmatpush.msra.mxu0 %v525
        %566 = vmatmul.f32.gmra.mxu0 %v376
        %v567 = vpop.f32.mrf.mxu0
        %v568 = vadd.f32 %v548, %v567
        %569 = vdwg.mxu0
        %570 = vrot.lane.b32.xlu0 %v525, 126
        %v571 = vpop.permute.xlu0 %570
        %573 = vmatpush.msra.mxu0 0.0
        %574 = vmatpush.msra.mxu0 0.0
        %575 = vmatpush.msra.mxu0 0.0
        %576 = vmatpush.msra.mxu0 0.0
        %577 = vmatpush.msra.mxu0 0.0
        %578 = vmatpush.msra.mxu0 0.0
        %579 = vmatpush.msra.mxu0 0.0
        %580 = vmatpush.msra.mxu0 0.0
        %581 = vmatpush.msra.mxu0 0.0
        %582 = vmatpush.msra.mxu0 0.0
        %583 = vmatpush.msra.mxu0 0.0
        %584 = vmatpush.msra.mxu0 0.0
        %585 = vmatpush.msra.mxu0 0.0
        %586 = vmatpush.msra.mxu0 0.0
        %587 = vmatpush.msra.mxu0 0.0
        %588 = vmatpush.msra.mxu0 %v571
        %589 = vmatmul.f32.gmra.mxu0 %v402
        %v590 = vpop.f32.mrf.mxu0
        %v591 = vadd.f32 0.0, %v590
        %592 = vdwg.mxu0
        %v593 = vadd.f32 %v568, %v591
        %594 = vrot.lane.b32.xlu0 %v525, 125
        %v595 = vpop.permute.xlu0 %594
        %597 = vmatpush.msra.mxu0 0.0
        %598 = vmatpush.msra.mxu0 0.0
        %599 = vmatpush.msra.mxu0 0.0
        %600 = vmatpush.msra.mxu0 0.0
        %601 = vmatpush.msra.mxu0 0.0
        %602 = vmatpush.msra.mxu0 0.0
        %603 = vmatpush.msra.mxu0 0.0
        %604 = vmatpush.msra.mxu0 0.0
        %605 = vmatpush.msra.mxu0 0.0
        %606 = vmatpush.msra.mxu0 0.0
        %607 = vmatpush.msra.mxu0 0.0
        %608 = vmatpush.msra.mxu0 0.0
        %609 = vmatpush.msra.mxu0 0.0
        %610 = vmatpush.msra.mxu0 0.0
        %611 = vmatpush.msra.mxu0 0.0
        %612 = vmatpush.msra.mxu0 %v595
        %613 = vmatmul.f32.gmra.mxu0 %v429
        %v614 = vpop.f32.mrf.mxu0
        %v615 = vadd.f32 0.0, %v614
        %616 = vdwg.mxu0
        %v617 = vadd.f32 %v593, %v615
        %v618 = vadd.f32 %v617, %v455
        %v619 = vmax.f32 %v618, 0.0
        %s620 = scalar_lea.vmem %s245, 8 [#allocation2]
        %621 = vst.msk [vmem:[%s620] sm:$0xff] %vm459, %v619
        %s622 = scalar_lea.vmem %s250, 8
        %v623 = vld [vmem:[%s622] sm:$0xf]
        %v625 = vrot.slane %v623, 4
        %626 = vrot.lane.b32.xlu0 %v625, 127
        %v627 = vpop.permute.xlu0 %626
        %629 = vrot.lane.b32.xlu0 %v623, 126
        %v630 = vpop.permute.xlu0 %629
        %632 = vrot.lane.b32.xlu0 %v625, 125
        %v633 = vpop.permute.xlu0 %632
        %v635 = vsel %vm280, %v623, %v627
        %v636 = vsel %vm280, %v630, %v633
        %v638 = vsel %vm283, %v635, 0
        %v641 = vsel %vm283, %v636, 0
        %643 = vmatpush.msra.mxu0 0.0
        %644 = vmatpush.msra.mxu0 0.0
        %645 = vmatpush.msra.mxu0 0.0
        %646 = vmatpush.msra.mxu0 0.0
        %647 = vmatpush.msra.mxu0 0.0
        %648 = vmatpush.msra.mxu0 0.0
        %649 = vmatpush.msra.mxu0 0.0
        %650 = vmatpush.msra.mxu0 0.0
        %651 = vmatpush.msra.mxu0 %v292
        %652 = vmatpush.msra.mxu0 %v266
        %653 = vmatpush.msra.mxu0 %v265
        %654 = vmatpush.msra.mxu0 %v264
        %655 = vmatpush.msra.mxu0 %v263
        %656 = vmatpush.msra.mxu0 %v262
        %657 = vmatpush.msra.mxu0 %v261
        %658 = vmatpush.msra.mxu0 %v260
        %659 = vmatmul.f32.gmra.mxu0 %v638
        %v660 = vpop.f32.mrf.mxu0
        %v661 = vadd.f32 0.0, %v660
        %662 = vmatmul.f32.gmra.mxu0 %v641
        %v663 = vpop.f32.mrf.mxu0
        %v664 = vadd.f32 0.0, %v663
        %665 = vdwg.mxu0
        %666 = vmatpush.msra.mxu0 0.0
        %667 = vmatpush.msra.mxu0 0.0
        %668 = vmatpush.msra.mxu0 0.0
        %669 = vmatpush.msra.mxu0 0.0
        %670 = vmatpush.msra.mxu0 0.0
        %671 = vmatpush.msra.mxu0 0.0
        %672 = vmatpush.msra.mxu0 0.0
        %673 = vmatpush.msra.mxu0 0.0
        %674 = vmatpush.msra.mxu0 0.0
        %675 = vmatpush.msra.mxu0 0.0
        %676 = vmatpush.msra.mxu0 0.0
        %677 = vmatpush.msra.mxu0 0.0
        %678 = vmatpush.msra.mxu0 0.0
        %679 = vmatpush.msra.mxu0 0.0
        %680 = vmatpush.msra.mxu0 %v664
        %681 = vmatpush.msra.mxu0 %v661
        %682 = vmatmul.f32.gmra.mxu0 %v324
        %v683 = vpop.f32.mrf.mxu0
        %v684 = vadd.f32 %v320, %v683
        %685 = vdwg.mxu0
        %v686 = vmax.f32 %v684, 0.0
        %688 = vrot.lane.b32.xlu0 %v686, 127
        %v689 = vpop.permute.xlu0 %688
        %691 = vmatpush.msra.mxu0 0.0
        %692 = vmatpush.msra.mxu0 0.0
        %693 = vmatpush.msra.mxu0 0.0
        %694 = vmatpush.msra.mxu0 0.0
        %695 = vmatpush.msra.mxu0 0.0
        %696 = vmatpush.msra.mxu0 0.0
        %697 = vmatpush.msra.mxu0 0.0
        %698 = vmatpush.msra.mxu0 0.0
        %699 = vmatpush.msra.mxu0 0.0
        %700 = vmatpush.msra.mxu0 0.0
        %701 = vmatpush.msra.mxu0 0.0
        %702 = vmatpush.msra.mxu0 0.0
        %703 = vmatpush.msra.mxu0 0.0
        %704 = vmatpush.msra.mxu0 0.0
        %705 = vmatpush.msra.mxu0 0.0
        %706 = vmatpush.msra.mxu0 %v689
        %707 = vmatmul.f32.gmra.mxu0 %v353
        %v708 = vpop.f32.mrf.mxu0
        %v709 = vadd.f32 0.0, %v708
        %710 = vdwg.mxu0
        %711 = vmatpush.msra.mxu0 0.0
        %712 = vmatpush.msra.mxu0 0.0
        %713 = vmatpush.msra.mxu0 0.0
        %714 = vmatpush.msra.mxu0 0.0
        %715 = vmatpush.msra.mxu0 0.0
        %716 = vmatpush.msra.mxu0 0.0
        %717 = vmatpush.msra.mxu0 0.0
        %718 = vmatpush.msra.mxu0 0.0
        %719 = vmatpush.msra.mxu0 0.0
        %720 = vmatpush.msra.mxu0 0.0
        %721 = vmatpush.msra.mxu0 0.0
        %722 = vmatpush.msra.mxu0 0.0
        %723 = vmatpush.msra.mxu0 0.0
        %724 = vmatpush.msra.mxu0 0.0
        %725 = vmatpush.msra.mxu0 0.0
        %726 = vmatpush.msra.mxu0 %v686
        %727 = vmatmul.f32.gmra.mxu0 %v376
        %v728 = vpop.f32.mrf.mxu0
        %v729 = vadd.f32 %v709, %v728
        %730 = vdwg.mxu0
        %731 = vrot.lane.b32.xlu0 %v686, 126
        %v732 = vpop.permute.xlu0 %731
        %734 = vmatpush.msra.mxu0 0.0
        %735 = vmatpush.msra.mxu0 0.0
        %736 = vmatpush.msra.mxu0 0.0
        %737 = vmatpush.msra.mxu0 0.0
        %738 = vmatpush.msra.mxu0 0.0
        %739 = vmatpush.msra.mxu0 0.0
        %740 = vmatpush.msra.mxu0 0.0
        %741 = vmatpush.msra.mxu0 0.0
        %742 = vmatpush.msra.mxu0 0.0
        %743 = vmatpush.msra.mxu0 0.0
        %744 = vmatpush.msra.mxu0 0.0
        %745 = vmatpush.msra.mxu0 0.0
        %746 = vmatpush.msra.mxu0 0.0
        %747 = vmatpush.msra.mxu0 0.0
        %748 = vmatpush.msra.mxu0 0.0
        %749 = vmatpush.msra.mxu0 %v732
        %750 = vmatmul.f32.gmra.mxu0 %v402
        %v751 = vpop.f32.mrf.mxu0
        %v752 = vadd.f32 0.0, %v751
        %753 = vdwg.mxu0
        %v754 = vadd.f32 %v729, %v752
        %755 = vrot.lane.b32.xlu0 %v686, 125
        %v756 = vpop.permute.xlu0 %755
        %758 = vmatpush.msra.mxu0 0.0
        %759 = vmatpush.msra.mxu0 0.0
        %760 = vmatpush.msra.mxu0 0.0
        %761 = vmatpush.msra.mxu0 0.0
        %762 = vmatpush.msra.mxu0 0.0
        %763 = vmatpush.msra.mxu0 0.0
        %764 = vmatpush.msra.mxu0 0.0
        %765 = vmatpush.msra.mxu0 0.0
        %766 = vmatpush.msra.mxu0 0.0
        %767 = vmatpush.msra.mxu0 0.0
        %768 = vmatpush.msra.mxu0 0.0
        %769 = vmatpush.msra.mxu0 0.0
        %770 = vmatpush.msra.mxu0 0.0
        %771 = vmatpush.msra.mxu0 0.0
        %772 = vmatpush.msra.mxu0 0.0
        %773 = vmatpush.msra.mxu0 %v756
        %774 = vmatmul.f32.gmra.mxu0 %v429
        %v775 = vpop.f32.mrf.mxu0
        %v776 = vadd.f32 0.0, %v775
        %777 = vdwg.mxu0
        %v778 = vadd.f32 %v754, %v776
        %v779 = vadd.f32 %v778, %v455
        %v780 = vmax.f32 %v779, 0.0
        %s781 = scalar_lea.vmem %s245, 16 [#allocation2]
        %782 = vst.msk [vmem:[%s781] sm:$0xff] %vm459, %v780
        %s783 = scalar_lea.vmem %s250, 12
        %v784 = vld [vmem:[%s783] sm:$0xf]
        %v786 = vrot.slane %v784, 4
        %787 = vrot.lane.b32.xlu0 %v786, 127
        %v788 = vpop.permute.xlu0 %787
        %790 = vrot.lane.b32.xlu0 %v784, 126
        %v791 = vpop.permute.xlu0 %790
        %793 = vrot.lane.b32.xlu0 %v786, 125
        %v794 = vpop.permute.xlu0 %793
        %v796 = vsel %vm280, %v784, %v788
        %v797 = vsel %vm280, %v791, %v794
        %v799 = vsel %vm283, %v796, 0
        %v802 = vsel %vm283, %v797, 0
        %804 = vmatpush.msra.mxu0 0.0
        %805 = vmatpush.msra.mxu0 0.0
        %806 = vmatpush.msra.mxu0 0.0
        %807 = vmatpush.msra.mxu0 0.0
        %808 = vmatpush.msra.mxu0 0.0
        %809 = vmatpush.msra.mxu0 0.0
        %810 = vmatpush.msra.mxu0 0.0
        %811 = vmatpush.msra.mxu0 0.0
        %812 = vmatpush.msra.mxu0 %v292
        %813 = vmatpush.msra.mxu0 %v266
        %814 = vmatpush.msra.mxu0 %v265
        %815 = vmatpush.msra.mxu0 %v264
        %816 = vmatpush.msra.mxu0 %v263
        %817 = vmatpush.msra.mxu0 %v262
        %818 = vmatpush.msra.mxu0 %v261
        %819 = vmatpush.msra.mxu0 %v260
        %820 = vmatmul.f32.gmra.mxu0 %v799
        %v821 = vpop.f32.mrf.mxu0
        %v822 = vadd.f32 0.0, %v821
        %823 = vmatmul.f32.gmra.mxu0 %v802
        %v824 = vpop.f32.mrf.mxu0
        %v825 = vadd.f32 0.0, %v824
        %826 = vdwg.mxu0
        %827 = vmatpush.msra.mxu0 0.0
        %828 = vmatpush.msra.mxu0 0.0
        %829 = vmatpush.msra.mxu0 0.0
        %830 = vmatpush.msra.mxu0 0.0
        %831 = vmatpush.msra.mxu0 0.0
        %832 = vmatpush.msra.mxu0 0.0
        %833 = vmatpush.msra.mxu0 0.0
        %834 = vmatpush.msra.mxu0 0.0
        %835 = vmatpush.msra.mxu0 0.0
        %836 = vmatpush.msra.mxu0 0.0
        %837 = vmatpush.msra.mxu0 0.0
        %838 = vmatpush.msra.mxu0 0.0
        %839 = vmatpush.msra.mxu0 0.0
        %840 = vmatpush.msra.mxu0 0.0
        %841 = vmatpush.msra.mxu0 %v825
        %842 = vmatpush.msra.mxu0 %v822
        %843 = vmatmul.f32.gmra.mxu0 %v324
        %v844 = vpop.f32.mrf.mxu0
        %v845 = vadd.f32 %v320, %v844
        %846 = vdwg.mxu0
        %v847 = vmax.f32 %v845, 0.0
        %849 = vrot.lane.b32.xlu0 %v847, 127
        %v850 = vpop.permute.xlu0 %849
        %852 = vmatpush.msra.mxu0 0.0
        %853 = vmatpush.msra.mxu0 0.0
        %854 = vmatpush.msra.mxu0 0.0
        %855 = vmatpush.msra.mxu0 0.0
        %856 = vmatpush.msra.mxu0 0.0
        %857 = vmatpush.msra.mxu0 0.0
        %858 = vmatpush.msra.mxu0 0.0
        %859 = vmatpush.msra.mxu0 0.0
        %860 = vmatpush.msra.mxu0 0.0
        %861 = vmatpush.msra.mxu0 0.0
        %862 = vmatpush.msra.mxu0 0.0
        %863 = vmatpush.msra.mxu0 0.0
        %864 = vmatpush.msra.mxu0 0.0
        %865 = vmatpush.msra.mxu0 0.0
        %866 = vmatpush.msra.mxu0 0.0
        %867 = vmatpush.msra.mxu0 %v850
        %868 = vmatmul.f32.gmra.mxu0 %v353
        %v869 = vpop.f32.mrf.mxu0
        %v870 = vadd.f32 0.0, %v869
        %871 = vdwg.mxu0
        %872 = vmatpush.msra.mxu0 0.0
        %873 = vmatpush.msra.mxu0 0.0
        %874 = vmatpush.msra.mxu0 0.0
        %875 = vmatpush.msra.mxu0 0.0
        %876 = vmatpush.msra.mxu0 0.0
        %877 = vmatpush.msra.mxu0 0.0
        %878 = vmatpush.msra.mxu0 0.0
        %879 = vmatpush.msra.mxu0 0.0
        %880 = vmatpush.msra.mxu0 0.0
        %881 = vmatpush.msra.mxu0 0.0
        %882 = vmatpush.msra.mxu0 0.0
        %883 = vmatpush.msra.mxu0 0.0
        %884 = vmatpush.msra.mxu0 0.0
        %885 = vmatpush.msra.mxu0 0.0
        %886 = vmatpush.msra.mxu0 0.0
        %887 = vmatpush.msra.mxu0 %v847
        %888 = vmatmul.f32.gmra.mxu0 %v376
        %v889 = vpop.f32.mrf.mxu0
        %v890 = vadd.f32 %v870, %v889
        %891 = vdwg.mxu0
        %892 = vrot.lane.b32.xlu0 %v847, 126
        %v893 = vpop.permute.xlu0 %892
        %895 = vmatpush.msra.mxu0 0.0
        %896 = vmatpush.msra.mxu0 0.0
        %897 = vmatpush.msra.mxu0 0.0
        %898 = vmatpush.msra.mxu0 0.0
        %899 = vmatpush.msra.mxu0 0.0
        %900 = vmatpush.msra.mxu0 0.0
        %901 = vmatpush.msra.mxu0 0.0
        %902 = vmatpush.msra.mxu0 0.0
        %903 = vmatpush.msra.mxu0 0.0
        %904 = vmatpush.msra.mxu0 0.0
        %905 = vmatpush.msra.mxu0 0.0
        %906 = vmatpush.msra.mxu0 0.0
        %907 = vmatpush.msra.mxu0 0.0
        %908 = vmatpush.msra.mxu0 0.0
        %909 = vmatpush.msra.mxu0 0.0
        %910 = vmatpush.msra.mxu0 %v893
        %911 = vmatmul.f32.gmra.mxu0 %v402
        %v912 = vpop.f32.mrf.mxu0
        %v913 = vadd.f32 0.0, %v912
        %914 = vdwg.mxu0
        %v915 = vadd.f32 %v890, %v913
        %916 = vrot.lane.b32.xlu0 %v847, 125
        %v917 = vpop.permute.xlu0 %916
        %919 = vmatpush.msra.mxu0 0.0
        %920 = vmatpush.msra.mxu0 0.0
        %921 = vmatpush.msra.mxu0 0.0
        %922 = vmatpush.msra.mxu0 0.0
        %923 = vmatpush.msra.mxu0 0.0
        %924 = vmatpush.msra.mxu0 0.0
        %925 = vmatpush.msra.mxu0 0.0
        %926 = vmatpush.msra.mxu0 0.0
        %927 = vmatpush.msra.mxu0 0.0
        %928 = vmatpush.msra.mxu0 0.0
        %929 = vmatpush.msra.mxu0 0.0
        %930 = vmatpush.msra.mxu0 0.0
        %931 = vmatpush.msra.mxu0 0.0
        %932 = vmatpush.msra.mxu0 0.0
        %933 = vmatpush.msra.mxu0 0.0
        %934 = vmatpush.msra.mxu0 %v917
        %935 = vmatmul.f32.gmra.mxu0 %v429
        %v936 = vpop.f32.mrf.mxu0
        %v937 = vadd.f32 0.0, %v936
        %938 = vdwg.mxu0
        %v939 = vadd.f32 %v915, %v937
        %v940 = vadd.f32 %v939, %v455
        %v941 = vmax.f32 %v940, 0.0
        %s942 = scalar_lea.vmem %s245, 24 [#allocation2]
        %943 = vst.msk [vmem:[%s942] sm:$0xff] %vm459, %v941
        %s944 = scalar_lea.vmem %s250, 16
        %v945 = vld [vmem:[%s944] sm:$0xf]
        %v947 = vrot.slane %v945, 4
        %948 = vrot.lane.b32.xlu0 %v947, 127
        %v949 = vpop.permute.xlu0 %948
        %951 = vrot.lane.b32.xlu0 %v945, 126
        %v952 = vpop.permute.xlu0 %951
        %954 = vrot.lane.b32.xlu0 %v947, 125
        %v955 = vpop.permute.xlu0 %954
        %v957 = vsel %vm280, %v945, %v949
        %v958 = vsel %vm280, %v952, %v955
        %v960 = vsel %vm283, %v957, 0
        %v963 = vsel %vm283, %v958, 0
        %965 = vmatpush.msra.mxu0 0.0
        %966 = vmatpush.msra.mxu0 0.0
        %967 = vmatpush.msra.mxu0 0.0
        %968 = vmatpush.msra.mxu0 0.0
        %969 = vmatpush.msra.mxu0 0.0
        %970 = vmatpush.msra.mxu0 0.0
        %971 = vmatpush.msra.mxu0 0.0
        %972 = vmatpush.msra.mxu0 0.0
        %973 = vmatpush.msra.mxu0 %v292
        %974 = vmatpush.msra.mxu0 %v266
        %975 = vmatpush.msra.mxu0 %v265
        %976 = vmatpush.msra.mxu0 %v264
        %977 = vmatpush.msra.mxu0 %v263
        %978 = vmatpush.msra.mxu0 %v262
        %979 = vmatpush.msra.mxu0 %v261
        %980 = vmatpush.msra.mxu0 %v260
        %981 = vmatmul.f32.gmra.mxu0 %v960
        %v982 = vpop.f32.mrf.mxu0
        %v983 = vadd.f32 0.0, %v982
        %984 = vmatmul.f32.gmra.mxu0 %v963
        %v985 = vpop.f32.mrf.mxu0
        %v986 = vadd.f32 0.0, %v985
        %987 = vdwg.mxu0
        %988 = vmatpush.msra.mxu0 0.0
        %989 = vmatpush.msra.mxu0 0.0
        %990 = vmatpush.msra.mxu0 0.0
        %991 = vmatpush.msra.mxu0 0.0
        %992 = vmatpush.msra.mxu0 0.0
        %993 = vmatpush.msra.mxu0 0.0
        %994 = vmatpush.msra.mxu0 0.0
        %995 = vmatpush.msra.mxu0 0.0
        %996 = vmatpush.msra.mxu0 0.0
        %997 = vmatpush.msra.mxu0 0.0
        %998 = vmatpush.msra.mxu0 0.0
        %999 = vmatpush.msra.mxu0 0.0
        %1000 = vmatpush.msra.mxu0 0.0
        %1001 = vmatpush.msra.mxu0 0.0
        %1002 = vmatpush.msra.mxu0 %v986
        %1003 = vmatpush.msra.mxu0 %v983
        %1004 = vmatmul.f32.gmra.mxu0 %v324
        %v1005 = vpop.f32.mrf.mxu0
        %v1006 = vadd.f32 %v320, %v1005
        %1007 = vdwg.mxu0
        %v1008 = vmax.f32 %v1006, 0.0
        %1010 = vrot.lane.b32.xlu0 %v1008, 127
        %v1011 = vpop.permute.xlu0 %1010
        %1013 = vmatpush.msra.mxu0 0.0
        %1014 = vmatpush.msra.mxu0 0.0
        %1015 = vmatpush.msra.mxu0 0.0
        %1016 = vmatpush.msra.mxu0 0.0
        %1017 = vmatpush.msra.mxu0 0.0
        %1018 = vmatpush.msra.mxu0 0.0
        %1019 = vmatpush.msra.mxu0 0.0
        %1020 = vmatpush.msra.mxu0 0.0
        %1021 = vmatpush.msra.mxu0 0.0
        %1022 = vmatpush.msra.mxu0 0.0
        %1023 = vmatpush.msra.mxu0 0.0
        %1024 = vmatpush.msra.mxu0 0.0
        %1025 = vmatpush.msra.mxu0 0.0
        %1026 = vmatpush.msra.mxu0 0.0
        %1027 = vmatpush.msra.mxu0 0.0
        %1028 = vmatpush.msra.mxu0 %v1011
        %1029 = vmatmul.f32.gmra.mxu0 %v353
        %v1030 = vpop.f32.mrf.mxu0
        %v1031 = vadd.f32 0.0, %v1030
        %1032 = vdwg.mxu0
        %1033 = vmatpush.msra.mxu0 0.0
        %1034 = vmatpush.msra.mxu0 0.0
        %1035 = vmatpush.msra.mxu0 0.0
        %1036 = vmatpush.msra.mxu0 0.0
        %1037 = vmatpush.msra.mxu0 0.0
        %1038 = vmatpush.msra.mxu0 0.0
        %1039 = vmatpush.msra.mxu0 0.0
        %1040 = vmatpush.msra.mxu0 0.0
        %1041 = vmatpush.msra.mxu0 0.0
        %1042 = vmatpush.msra.mxu0 0.0
        %1043 = vmatpush.msra.mxu0 0.0
        %1044 = vmatpush.msra.mxu0 0.0
        %1045 = vmatpush.msra.mxu0 0.0
        %1046 = vmatpush.msra.mxu0 0.0
        %1047 = vmatpush.msra.mxu0 0.0
        %1048 = vmatpush.msra.mxu0 %v1008
        %1049 = vmatmul.f32.gmra.mxu0 %v376
        %v1050 = vpop.f32.mrf.mxu0
        %v1051 = vadd.f32 %v1031, %v1050
        %1052 = vdwg.mxu0
        %1053 = vrot.lane.b32.xlu0 %v1008, 126
        %v1054 = vpop.permute.xlu0 %1053
        %1056 = vmatpush.msra.mxu0 0.0
        %1057 = vmatpush.msra.mxu0 0.0
        %1058 = vmatpush.msra.mxu0 0.0
        %1059 = vmatpush.msra.mxu0 0.0
        %1060 = vmatpush.msra.mxu0 0.0
        %1061 = vmatpush.msra.mxu0 0.0
        %1062 = vmatpush.msra.mxu0 0.0
        %1063 = vmatpush.msra.mxu0 0.0
        %1064 = vmatpush.msra.mxu0 0.0
        %1065 = vmatpush.msra.mxu0 0.0
        %1066 = vmatpush.msra.mxu0 0.0
        %1067 = vmatpush.msra.mxu0 0.0
        %1068 = vmatpush.msra.mxu0 0.0
        %1069 = vmatpush.msra.mxu0 0.0
        %1070 = vmatpush.msra.mxu0 0.0
        %1071 = vmatpush.msra.mxu0 %v1054
        %1072 = vmatmul.f32.gmra.mxu0 %v402
        %v1073 = vpop.f32.mrf.mxu0
        %v1074 = vadd.f32 0.0, %v1073
        %1075 = vdwg.mxu0
        %v1076 = vadd.f32 %v1051, %v1074
        %1077 = vrot.lane.b32.xlu0 %v1008, 125
        %v1078 = vpop.permute.xlu0 %1077
        %1080 = vmatpush.msra.mxu0 0.0
        %1081 = vmatpush.msra.mxu0 0.0
        %1082 = vmatpush.msra.mxu0 0.0
        %1083 = vmatpush.msra.mxu0 0.0
        %1084 = vmatpush.msra.mxu0 0.0
        %1085 = vmatpush.msra.mxu0 0.0
        %1086 = vmatpush.msra.mxu0 0.0
        %1087 = vmatpush.msra.mxu0 0.0
        %1088 = vmatpush.msra.mxu0 0.0
        %1089 = vmatpush.msra.mxu0 0.0
        %1090 = vmatpush.msra.mxu0 0.0
        %1091 = vmatpush.msra.mxu0 0.0
        %1092 = vmatpush.msra.mxu0 0.0
        %1093 = vmatpush.msra.mxu0 0.0
        %1094 = vmatpush.msra.mxu0 0.0
        %1095 = vmatpush.msra.mxu0 %v1078
        %1096 = vmatmul.f32.gmra.mxu0 %v429
        %v1097 = vpop.f32.mrf.mxu0
        %v1098 = vadd.f32 0.0, %v1097
        %1099 = vdwg.mxu0
        %v1100 = vadd.f32 %v1076, %v1098
        %v1101 = vadd.f32 %v1100, %v455
        %v1102 = vmax.f32 %v1101, 0.0
        %s1103 = scalar_lea.vmem %s245, 32 [#allocation2]
        %1104 = vst.msk [vmem:[%s1103] sm:$0xff] %vm459, %v1102
        %s1105 = scalar_lea.vmem %s250, 20
        %v1106 = vld [vmem:[%s1105] sm:$0xf]
        %v1108 = vrot.slane %v1106, 4
        %1109 = vrot.lane.b32.xlu0 %v1108, 127
        %v1110 = vpop.permute.xlu0 %1109
        %1112 = vrot.lane.b32.xlu0 %v1106, 126
        %v1113 = vpop.permute.xlu0 %1112
        %1115 = vrot.lane.b32.xlu0 %v1108, 125
        %v1116 = vpop.permute.xlu0 %1115
        %v1118 = vsel %vm280, %v1106, %v1110
        %v1119 = vsel %vm280, %v1113, %v1116
        %v1121 = vsel %vm283, %v1118, 0
        %v1124 = vsel %vm283, %v1119, 0
        %1126 = vmatpush.msra.mxu0 0.0
        %1127 = vmatpush.msra.mxu0 0.0
        %1128 = vmatpush.msra.mxu0 0.0
        %1129 = vmatpush.msra.mxu0 0.0
        %1130 = vmatpush.msra.mxu0 0.0
        %1131 = vmatpush.msra.mxu0 0.0
        %1132 = vmatpush.msra.mxu0 0.0
        %1133 = vmatpush.msra.mxu0 0.0
        %1134 = vmatpush.msra.mxu0 %v292
        %1135 = vmatpush.msra.mxu0 %v266
        %1136 = vmatpush.msra.mxu0 %v265
        %1137 = vmatpush.msra.mxu0 %v264
        %1138 = vmatpush.msra.mxu0 %v263
        %1139 = vmatpush.msra.mxu0 %v262
        %1140 = vmatpush.msra.mxu0 %v261
        %1141 = vmatpush.msra.mxu0 %v260
        %1142 = vmatmul.f32.gmra.mxu0 %v1121
        %v1143 = vpop.f32.mrf.mxu0
        %v1144 = vadd.f32 0.0, %v1143
        %1145 = vmatmul.f32.gmra.mxu0 %v1124
        %v1146 = vpop.f32.mrf.mxu0
        %v1147 = vadd.f32 0.0, %v1146
        %1148 = vdwg.mxu0
        %1149 = vmatpush.msra.mxu0 0.0
        %1150 = vmatpush.msra.mxu0 0.0
        %1151 = vmatpush.msra.mxu0 0.0
        %1152 = vmatpush.msra.mxu0 0.0
        %1153 = vmatpush.msra.mxu0 0.0
        %1154 = vmatpush.msra.mxu0 0.0
        %1155 = vmatpush.msra.mxu0 0.0
        %1156 = vmatpush.msra.mxu0 0.0
        %1157 = vmatpush.msra.mxu0 0.0
        %1158 = vmatpush.msra.mxu0 0.0
        %1159 = vmatpush.msra.mxu0 0.0
        %1160 = vmatpush.msra.mxu0 0.0
        %1161 = vmatpush.msra.mxu0 0.0
        %1162 = vmatpush.msra.mxu0 0.0
        %1163 = vmatpush.msra.mxu0 %v1147
        %1164 = vmatpush.msra.mxu0 %v1144
        %1165 = vmatmul.f32.gmra.mxu0 %v324
        %v1166 = vpop.f32.mrf.mxu0
        %v1167 = vadd.f32 %v320, %v1166
        %1168 = vdwg.mxu0
        %v1169 = vmax.f32 %v1167, 0.0
        %1171 = vrot.lane.b32.xlu0 %v1169, 127
        %v1172 = vpop.permute.xlu0 %1171
        %1174 = vmatpush.msra.mxu0 0.0
        %1175 = vmatpush.msra.mxu0 0.0
        %1176 = vmatpush.msra.mxu0 0.0
        %1177 = vmatpush.msra.mxu0 0.0
        %1178 = vmatpush.msra.mxu0 0.0
        %1179 = vmatpush.msra.mxu0 0.0
        %1180 = vmatpush.msra.mxu0 0.0
        %1181 = vmatpush.msra.mxu0 0.0
        %1182 = vmatpush.msra.mxu0 0.0
        %1183 = vmatpush.msra.mxu0 0.0
        %1184 = vmatpush.msra.mxu0 0.0
        %1185 = vmatpush.msra.mxu0 0.0
        %1186 = vmatpush.msra.mxu0 0.0
        %1187 = vmatpush.msra.mxu0 0.0
        %1188 = vmatpush.msra.mxu0 0.0
        %1189 = vmatpush.msra.mxu0 %v1172
        %1190 = vmatmul.f32.gmra.mxu0 %v353
        %v1191 = vpop.f32.mrf.mxu0
        %v1192 = vadd.f32 0.0, %v1191
        %1193 = vdwg.mxu0
        %1194 = vmatpush.msra.mxu0 0.0
        %1195 = vmatpush.msra.mxu0 0.0
        %1196 = vmatpush.msra.mxu0 0.0
        %1197 = vmatpush.msra.mxu0 0.0
        %1198 = vmatpush.msra.mxu0 0.0
        %1199 = vmatpush.msra.mxu0 0.0
        %1200 = vmatpush.msra.mxu0 0.0
        %1201 = vmatpush.msra.mxu0 0.0
        %1202 = vmatpush.msra.mxu0 0.0
        %1203 = vmatpush.msra.mxu0 0.0
        %1204 = vmatpush.msra.mxu0 0.0
        %1205 = vmatpush.msra.mxu0 0.0
        %1206 = vmatpush.msra.mxu0 0.0
        %1207 = vmatpush.msra.mxu0 0.0
        %1208 = vmatpush.msra.mxu0 0.0
        %1209 = vmatpush.msra.mxu0 %v1169
        %1210 = vmatmul.f32.gmra.mxu0 %v376
        %v1211 = vpop.f32.mrf.mxu0
        %v1212 = vadd.f32 %v1192, %v1211
        %1213 = vdwg.mxu0
        %1214 = vrot.lane.b32.xlu0 %v1169, 126
        %v1215 = vpop.permute.xlu0 %1214
        %1217 = vmatpush.msra.mxu0 0.0
        %1218 = vmatpush.msra.mxu0 0.0
        %1219 = vmatpush.msra.mxu0 0.0
        %1220 = vmatpush.msra.mxu0 0.0
        %1221 = vmatpush.msra.mxu0 0.0
        %1222 = vmatpush.msra.mxu0 0.0
        %1223 = vmatpush.msra.mxu0 0.0
        %1224 = vmatpush.msra.mxu0 0.0
        %1225 = vmatpush.msra.mxu0 0.0
        %1226 = vmatpush.msra.mxu0 0.0
        %1227 = vmatpush.msra.mxu0 0.0
        %1228 = vmatpush.msra.mxu0 0.0
        %1229 = vmatpush.msra.mxu0 0.0
        %1230 = vmatpush.msra.mxu0 0.0
        %1231 = vmatpush.msra.mxu0 0.0
        %1232 = vmatpush.msra.mxu0 %v1215
        %1233 = vmatmul.f32.gmra.mxu0 %v402
        %v1234 = vpop.f32.mrf.mxu0
        %v1235 = vadd.f32 0.0, %v1234
        %1236 = vdwg.mxu0
        %v1237 = vadd.f32 %v1212, %v1235
        %1238 = vrot.lane.b32.xlu0 %v1169, 125
        %v1239 = vpop.permute.xlu0 %1238
        %1241 = vmatpush.msra.mxu0 0.0
        %1242 = vmatpush.msra.mxu0 0.0
        %1243 = vmatpush.msra.mxu0 0.0
        %1244 = vmatpush.msra.mxu0 0.0
        %1245 = vmatpush.msra.mxu0 0.0
        %1246 = vmatpush.msra.mxu0 0.0
        %1247 = vmatpush.msra.mxu0 0.0
        %1248 = vmatpush.msra.mxu0 0.0
        %1249 = vmatpush.msra.mxu0 0.0
        %1250 = vmatpush.msra.mxu0 0.0
        %1251 = vmatpush.msra.mxu0 0.0
        %1252 = vmatpush.msra.mxu0 0.0
        %1253 = vmatpush.msra.mxu0 0.0
        %1254 = vmatpush.msra.mxu0 0.0
        %1255 = vmatpush.msra.mxu0 0.0
        %1256 = vmatpush.msra.mxu0 %v1239
        %1257 = vmatmul.f32.gmra.mxu0 %v429
        %v1258 = vpop.f32.mrf.mxu0
        %v1259 = vadd.f32 0.0, %v1258
        %1260 = vdwg.mxu0
        %v1261 = vadd.f32 %v1237, %v1259
        %v1262 = vadd.f32 %v1261, %v455
        %v1263 = vmax.f32 %v1262, 0.0
        %s1264 = scalar_lea.vmem %s245, 40 [#allocation2]
        %1265 = vst.msk [vmem:[%s1264] sm:$0xff] %vm459, %v1263
        %s1266 = scalar_lea.vmem %s250, 24
        %v1267 = vld [vmem:[%s1266] sm:$0xf]
        %v1269 = vrot.slane %v1267, 4
        %1270 = vrot.lane.b32.xlu0 %v1269, 127
        %v1271 = vpop.permute.xlu0 %1270
        %1273 = vrot.lane.b32.xlu0 %v1267, 126
        %v1274 = vpop.permute.xlu0 %1273
        %1276 = vrot.lane.b32.xlu0 %v1269, 125
        %v1277 = vpop.permute.xlu0 %1276
        %v1279 = vsel %vm280, %v1267, %v1271
        %v1280 = vsel %vm280, %v1274, %v1277
        %v1282 = vsel %vm283, %v1279, 0
        %v1285 = vsel %vm283, %v1280, 0
        %1287 = vmatpush.msra.mxu0 0.0
        %1288 = vmatpush.msra.mxu0 0.0
        %1289 = vmatpush.msra.mxu0 0.0
        %1290 = vmatpush.msra.mxu0 0.0
        %1291 = vmatpush.msra.mxu0 0.0
        %1292 = vmatpush.msra.mxu0 0.0
        %1293 = vmatpush.msra.mxu0 0.0
        %1294 = vmatpush.msra.mxu0 0.0
        %1295 = vmatpush.msra.mxu0 %v292
        %1296 = vmatpush.msra.mxu0 %v266
        %1297 = vmatpush.msra.mxu0 %v265
        %1298 = vmatpush.msra.mxu0 %v264
        %1299 = vmatpush.msra.mxu0 %v263
        %1300 = vmatpush.msra.mxu0 %v262
        %1301 = vmatpush.msra.mxu0 %v261
        %1302 = vmatpush.msra.mxu0 %v260
        %1303 = vmatmul.f32.gmra.mxu0 %v1282
        %v1304 = vpop.f32.mrf.mxu0
        %v1305 = vadd.f32 0.0, %v1304
        %1306 = vmatmul.f32.gmra.mxu0 %v1285
        %v1307 = vpop.f32.mrf.mxu0
        %v1308 = vadd.f32 0.0, %v1307
        %1309 = vdwg.mxu0
        %1310 = vmatpush.msra.mxu0 0.0
        %1311 = vmatpush.msra.mxu0 0.0
        %1312 = vmatpush.msra.mxu0 0.0
        %1313 = vmatpush.msra.mxu0 0.0
        %1314 = vmatpush.msra.mxu0 0.0
        %1315 = vmatpush.msra.mxu0 0.0
        %1316 = vmatpush.msra.mxu0 0.0
        %1317 = vmatpush.msra.mxu0 0.0
        %1318 = vmatpush.msra.mxu0 0.0
        %1319 = vmatpush.msra.mxu0 0.0
        %1320 = vmatpush.msra.mxu0 0.0
        %1321 = vmatpush.msra.mxu0 0.0
        %1322 = vmatpush.msra.mxu0 0.0
        %1323 = vmatpush.msra.mxu0 0.0
        %1324 = vmatpush.msra.mxu0 %v1308
        %1325 = vmatpush.msra.mxu0 %v1305
        %1326 = vmatmul.f32.gmra.mxu0 %v324
        %v1327 = vpop.f32.mrf.mxu0
        %v1328 = vadd.f32 %v320, %v1327
        %1329 = vdwg.mxu0
        %v1330 = vmax.f32 %v1328, 0.0
        %1332 = vrot.lane.b32.xlu0 %v1330, 127
        %v1333 = vpop.permute.xlu0 %1332
        %1335 = vmatpush.msra.mxu0 0.0
        %1336 = vmatpush.msra.mxu0 0.0
        %1337 = vmatpush.msra.mxu0 0.0
        %1338 = vmatpush.msra.mxu0 0.0
        %1339 = vmatpush.msra.mxu0 0.0
        %1340 = vmatpush.msra.mxu0 0.0
        %1341 = vmatpush.msra.mxu0 0.0
        %1342 = vmatpush.msra.mxu0 0.0
        %1343 = vmatpush.msra.mxu0 0.0
        %1344 = vmatpush.msra.mxu0 0.0
        %1345 = vmatpush.msra.mxu0 0.0
        %1346 = vmatpush.msra.mxu0 0.0
        %1347 = vmatpush.msra.mxu0 0.0
        %1348 = vmatpush.msra.mxu0 0.0
        %1349 = vmatpush.msra.mxu0 0.0
        %1350 = vmatpush.msra.mxu0 %v1333
        %1351 = vmatmul.f32.gmra.mxu0 %v353
        %v1352 = vpop.f32.mrf.mxu0
        %v1353 = vadd.f32 0.0, %v1352
        %1354 = vdwg.mxu0
        %1355 = vmatpush.msra.mxu0 0.0
        %1356 = vmatpush.msra.mxu0 0.0
        %1357 = vmatpush.msra.mxu0 0.0
        %1358 = vmatpush.msra.mxu0 0.0
        %1359 = vmatpush.msra.mxu0 0.0
        %1360 = vmatpush.msra.mxu0 0.0
        %1361 = vmatpush.msra.mxu0 0.0
        %1362 = vmatpush.msra.mxu0 0.0
        %1363 = vmatpush.msra.mxu0 0.0
        %1364 = vmatpush.msra.mxu0 0.0
        %1365 = vmatpush.msra.mxu0 0.0
        %1366 = vmatpush.msra.mxu0 0.0
        %1367 = vmatpush.msra.mxu0 0.0
        %1368 = vmatpush.msra.mxu0 0.0
        %1369 = vmatpush.msra.mxu0 0.0
        %1370 = vmatpush.msra.mxu0 %v1330
        %1371 = vmatmul.f32.gmra.mxu0 %v376
        %v1372 = vpop.f32.mrf.mxu0
        %v1373 = vadd.f32 %v1353, %v1372
        %1374 = vdwg.mxu0
        %1375 = vrot.lane.b32.xlu0 %v1330, 126
        %v1376 = vpop.permute.xlu0 %1375
        %1378 = vmatpush.msra.mxu0 0.0
        %1379 = vmatpush.msra.mxu0 0.0
        %1380 = vmatpush.msra.mxu0 0.0
        %1381 = vmatpush.msra.mxu0 0.0
        %1382 = vmatpush.msra.mxu0 0.0
        %1383 = vmatpush.msra.mxu0 0.0
        %1384 = vmatpush.msra.mxu0 0.0
        %1385 = vmatpush.msra.mxu0 0.0
        %1386 = vmatpush.msra.mxu0 0.0
        %1387 = vmatpush.msra.mxu0 0.0
        %1388 = vmatpush.msra.mxu0 0.0
        %1389 = vmatpush.msra.mxu0 0.0
        %1390 = vmatpush.msra.mxu0 0.0
        %1391 = vmatpush.msra.mxu0 0.0
        %1392 = vmatpush.msra.mxu0 0.0
        %1393 = vmatpush.msra.mxu0 %v1376
        %1394 = vmatmul.f32.gmra.mxu0 %v402
        %v1395 = vpop.f32.mrf.mxu0
        %v1396 = vadd.f32 0.0, %v1395
        %1397 = vdwg.mxu0
        %v1398 = vadd.f32 %v1373, %v1396
        %1399 = vrot.lane.b32.xlu0 %v1330, 125
        %v1400 = vpop.permute.xlu0 %1399
        %1402 = vmatpush.msra.mxu0 0.0
        %1403 = vmatpush.msra.mxu0 0.0
        %1404 = vmatpush.msra.mxu0 0.0
        %1405 = vmatpush.msra.mxu0 0.0
        %1406 = vmatpush.msra.mxu0 0.0
        %1407 = vmatpush.msra.mxu0 0.0
        %1408 = vmatpush.msra.mxu0 0.0
        %1409 = vmatpush.msra.mxu0 0.0
        %1410 = vmatpush.msra.mxu0 0.0
        %1411 = vmatpush.msra.mxu0 0.0
        %1412 = vmatpush.msra.mxu0 0.0
        %1413 = vmatpush.msra.mxu0 0.0
        %1414 = vmatpush.msra.mxu0 0.0
        %1415 = vmatpush.msra.mxu0 0.0
        %1416 = vmatpush.msra.mxu0 0.0
        %1417 = vmatpush.msra.mxu0 %v1400
        %1418 = vmatmul.f32.gmra.mxu0 %v429
        %v1419 = vpop.f32.mrf.mxu0
        %v1420 = vadd.f32 0.0, %v1419
        %1421 = vdwg.mxu0
        %v1422 = vadd.f32 %v1398, %v1420
        %v1423 = vadd.f32 %v1422, %v455
        %v1424 = vmax.f32 %v1423, 0.0
        %s1425 = scalar_lea.vmem %s245, 48 [#allocation2]
        %1426 = vst.msk [vmem:[%s1425] sm:$0xff] %vm459, %v1424
        %s1427 = scalar_lea.vmem %s250, 28
        %v1428 = vld [vmem:[%s1427] sm:$0xf]
        %v1430 = vrot.slane %v1428, 4
        %1431 = vrot.lane.b32.xlu0 %v1430, 127
        %v1432 = vpop.permute.xlu0 %1431
        %1434 = vrot.lane.b32.xlu0 %v1428, 126
        %v1435 = vpop.permute.xlu0 %1434
        %1437 = vrot.lane.b32.xlu0 %v1430, 125
        %v1438 = vpop.permute.xlu0 %1437
        %v1440 = vsel %vm280, %v1428, %v1432
        %v1441 = vsel %vm280, %v1435, %v1438
        %v1443 = vsel %vm283, %v1440, 0
        %v1446 = vsel %vm283, %v1441, 0
        %1448 = vmatpush.msra.mxu0 0.0
        %1449 = vmatpush.msra.mxu0 0.0
        %1450 = vmatpush.msra.mxu0 0.0
        %1451 = vmatpush.msra.mxu0 0.0
        %1452 = vmatpush.msra.mxu0 0.0
        %1453 = vmatpush.msra.mxu0 0.0
        %1454 = vmatpush.msra.mxu0 0.0
        %1455 = vmatpush.msra.mxu0 0.0
        %1456 = vmatpush.msra.mxu0 %v292
        %1457 = vmatpush.msra.mxu0 %v266
        %1458 = vmatpush.msra.mxu0 %v265
        %1459 = vmatpush.msra.mxu0 %v264
        %1460 = vmatpush.msra.mxu0 %v263
        %1461 = vmatpush.msra.mxu0 %v262
        %1462 = vmatpush.msra.mxu0 %v261
        %1463 = vmatpush.msra.mxu0 %v260
        %1464 = vmatmul.f32.gmra.mxu0 %v1443
        %v1465 = vpop.f32.mrf.mxu0
        %v1466 = vadd.f32 0.0, %v1465
        %1467 = vmatmul.f32.gmra.mxu0 %v1446
        %v1468 = vpop.f32.mrf.mxu0
        %v1469 = vadd.f32 0.0, %v1468
        %1470 = vdwg.mxu0
        %1471 = vmatpush.msra.mxu0 0.0
        %1472 = vmatpush.msra.mxu0 0.0
        %1473 = vmatpush.msra.mxu0 0.0
        %1474 = vmatpush.msra.mxu0 0.0
        %1475 = vmatpush.msra.mxu0 0.0
        %1476 = vmatpush.msra.mxu0 0.0
        %1477 = vmatpush.msra.mxu0 0.0
        %1478 = vmatpush.msra.mxu0 0.0
        %1479 = vmatpush.msra.mxu0 0.0
        %1480 = vmatpush.msra.mxu0 0.0
        %1481 = vmatpush.msra.mxu0 0.0
        %1482 = vmatpush.msra.mxu0 0.0
        %1483 = vmatpush.msra.mxu0 0.0
        %1484 = vmatpush.msra.mxu0 0.0
        %1485 = vmatpush.msra.mxu0 %v1469
        %1486 = vmatpush.msra.mxu0 %v1466
        %1487 = vmatmul.f32.gmra.mxu0 %v324
        %v1488 = vpop.f32.mrf.mxu0
        %v1489 = vadd.f32 %v320, %v1488
        %1490 = vdwg.mxu0
        %v1491 = vmax.f32 %v1489, 0.0
        %1493 = vrot.lane.b32.xlu0 %v1491, 127
        %v1494 = vpop.permute.xlu0 %1493
        %1496 = vmatpush.msra.mxu0 0.0
        %1497 = vmatpush.msra.mxu0 0.0
        %1498 = vmatpush.msra.mxu0 0.0
        %1499 = vmatpush.msra.mxu0 0.0
        %1500 = vmatpush.msra.mxu0 0.0
        %1501 = vmatpush.msra.mxu0 0.0
        %1502 = vmatpush.msra.mxu0 0.0
        %1503 = vmatpush.msra.mxu0 0.0
        %1504 = vmatpush.msra.mxu0 0.0
        %1505 = vmatpush.msra.mxu0 0.0
        %1506 = vmatpush.msra.mxu0 0.0
        %1507 = vmatpush.msra.mxu0 0.0
        %1508 = vmatpush.msra.mxu0 0.0
        %1509 = vmatpush.msra.mxu0 0.0
        %1510 = vmatpush.msra.mxu0 0.0
        %1511 = vmatpush.msra.mxu0 %v1494
        %1512 = vmatmul.f32.gmra.mxu0 %v353
        %v1513 = vpop.f32.mrf.mxu0
        %v1514 = vadd.f32 0.0, %v1513
        %1515 = vdwg.mxu0
        %1516 = vmatpush.msra.mxu0 0.0
        %1517 = vmatpush.msra.mxu0 0.0
        %1518 = vmatpush.msra.mxu0 0.0
        %1519 = vmatpush.msra.mxu0 0.0
        %1520 = vmatpush.msra.mxu0 0.0
        %1521 = vmatpush.msra.mxu0 0.0
        %1522 = vmatpush.msra.mxu0 0.0
        %1523 = vmatpush.msra.mxu0 0.0
        %1524 = vmatpush.msra.mxu0 0.0
        %1525 = vmatpush.msra.mxu0 0.0
        %1526 = vmatpush.msra.mxu0 0.0
        %1527 = vmatpush.msra.mxu0 0.0
        %1528 = vmatpush.msra.mxu0 0.0
        %1529 = vmatpush.msra.mxu0 0.0
        %1530 = vmatpush.msra.mxu0 0.0
        %1531 = vmatpush.msra.mxu0 %v1491
        %1532 = vmatmul.f32.gmra.mxu0 %v376
        %v1533 = vpop.f32.mrf.mxu0
        %v1534 = vadd.f32 %v1514, %v1533
        %1535 = vdwg.mxu0
        %1536 = vrot.lane.b32.xlu0 %v1491, 126
        %v1537 = vpop.permute.xlu0 %1536
        %1539 = vmatpush.msra.mxu0 0.0
        %1540 = vmatpush.msra.mxu0 0.0
        %1541 = vmatpush.msra.mxu0 0.0
        %1542 = vmatpush.msra.mxu0 0.0
        %1543 = vmatpush.msra.mxu0 0.0
        %1544 = vmatpush.msra.mxu0 0.0
        %1545 = vmatpush.msra.mxu0 0.0
        %1546 = vmatpush.msra.mxu0 0.0
        %1547 = vmatpush.msra.mxu0 0.0
        %1548 = vmatpush.msra.mxu0 0.0
        %1549 = vmatpush.msra.mxu0 0.0
        %1550 = vmatpush.msra.mxu0 0.0
        %1551 = vmatpush.msra.mxu0 0.0
        %1552 = vmatpush.msra.mxu0 0.0
        %1553 = vmatpush.msra.mxu0 0.0
        %1554 = vmatpush.msra.mxu0 %v1537
        %1555 = vmatmul.f32.gmra.mxu0 %v402
        %v1556 = vpop.f32.mrf.mxu0
        %v1557 = vadd.f32 0.0, %v1556
        %1558 = vdwg.mxu0
        %v1559 = vadd.f32 %v1534, %v1557
        %1560 = vrot.lane.b32.xlu0 %v1491, 125
        %v1561 = vpop.permute.xlu0 %1560
        %1563 = vmatpush.msra.mxu0 0.0
        %1564 = vmatpush.msra.mxu0 0.0
        %1565 = vmatpush.msra.mxu0 0.0
        %1566 = vmatpush.msra.mxu0 0.0
        %1567 = vmatpush.msra.mxu0 0.0
        %1568 = vmatpush.msra.mxu0 0.0
        %1569 = vmatpush.msra.mxu0 0.0
        %1570 = vmatpush.msra.mxu0 0.0
        %1571 = vmatpush.msra.mxu0 0.0
        %1572 = vmatpush.msra.mxu0 0.0
        %1573 = vmatpush.msra.mxu0 0.0
        %1574 = vmatpush.msra.mxu0 0.0
        %1575 = vmatpush.msra.mxu0 0.0
        %1576 = vmatpush.msra.mxu0 0.0
        %1577 = vmatpush.msra.mxu0 0.0
        %1578 = vmatpush.msra.mxu0 %v1561
        %1579 = vmatmul.f32.gmra.mxu0 %v429
        %v1580 = vpop.f32.mrf.mxu0
        %v1581 = vadd.f32 0.0, %v1580
        %1582 = vdwg.mxu0
        %v1583 = vadd.f32 %v1559, %v1581
        %v1584 = vadd.f32 %v1583, %v455
        %v1585 = vmax.f32 %v1584, 0.0
        %s1586 = scalar_lea.vmem %s245, 56 [#allocation2]
        %1587 = vst.msk [vmem:[%s1586] sm:$0xff] %vm459, %v1585
        %s1588 = sand.u32 %s159, 1
        %s1589 = scalar_lea.sflag [#allocation3], %s1588
        %s1590 = sand.u32 %s159, 1
        %s1591 = smul.addr %s1590, 64
        %s1592 = scalar_lea.vmem [#allocation2], %s1591
        // Predicated region
        $region45: #{tpu_custom_call.1} parent=43 // pred_check
          %p1593 = pneg %p169
        $region46: #{tpu_custom_call.1} parent=43 // pred_check_branch
          %1595 = sbr.rel (%p1593) target = $region48
        $region47: #{tpu_custom_call.1} parent=43 // pred_region
          %s1596 = smul.u32 8, %s20
          %1598 = vsyncadd %s1589, 0
          %s1599 = smul.addr %s1596, 8
          %s1600 = scalar_lea.hbm %s6, %s1599
          %s1601 = sshll.u32 %s1592, 4
          %s1602 = int_to_ptr.vmem [resolvable:$true] %s1601
          %s1603 = sshll.u32 %s1600, 4
          %s1604 = int_to_ptr.hbm [resolvable:$true] %s1603
          %1609 = dma.vmem_to_hbm [thread:$0]  %s1602, 1024, %s1604, %s1589, 128, 128, 8
        $region48: #{tpu_custom_call.1} parent=43 // pred_fallthru
          _
      $region44: #{tpu_custom_call.1} parent=5 // pred_fallthru
        _
      %p1610 = scmp.le.s32.totalorder 2, %s15
      // Predicated region
      $region49: #{tpu_custom_call.1} parent=5 // pred_check
        %p1611 = pneg %p1610
      $region50: #{tpu_custom_call.1} parent=5 // pred_check_branch
        %1613 = sbr.rel (%p1611) target = $region52
      $region51: #{tpu_custom_call.1} parent=5 // pred_region
        %s1614 = ssub.s32 %s15, 2
        // Predicated region
        $region53: #{tpu_custom_call.1} parent=51 // pred_check
          %p1615 = pneg %p175
        $region54: #{tpu_custom_call.1} parent=51 // pred_check_branch
          %1617 = sbr.rel (%p1615) target = $region56
        $region55: #{tpu_custom_call.1} parent=51 // pred_region
          %s1618 = sand.u32 %s160, 1
          %s1619 = scalar_lea.sflag [#allocation3], %s1618
          %s1620 = sand.u32 %s160, 1
          %s1621 = smul.addr %s1620, 64
          %s1622 = scalar_lea.vmem [#allocation2], %s1621
          %1624 = dma.done %s1619, 1024
        $region56: #{tpu_custom_call.1} parent=51 // pred_fallthru
          _
      $region52: #{tpu_custom_call.1} parent=5 // pred_fallthru
        _
    $region6: #{tpu_custom_call.1} parent=1 // loop_footer
      %s19 = sadd.s32 1, %s15
    $region7: #{tpu_custom_call.1} parent=1 // loop_footer_branch
      %14 = sbr.rel target = $region3
    $region8: #{tpu_custom_call.1} parent=1 // loop_exit
      _
    %1625 = vsyncpa [#allocation3], 1
    %s1626 = scalar_lea.sflag [#allocation3], 1
    %1627 = vsyncpa %s1626, 1

</llo_original>
